<compile_context>
chip_gen: v7x
topology: tpu7x:2x2x1
jax: 0.10.0
libtpu: 0.0.40
codegen_flags: <defaults>
</compile_context>

<pallas_src>
import functools

import jax
import jax.numpy as jnp
from jax.experimental import pallas as pl
from jax.experimental.pallas import tpu as pltpu

D_IN = 28 * 28          # 784 (== full last dim of x, no K padding needed)
H1 = 512
H2 = 128
D_OUT = 10
D_OUT_PAD = 128         # lane-dense output width (cols 10..127 are zero)
L1_CHUNK = 256          # H1 slice width for the fused layer-1/2 loop


def mlp_kernel(x_ref, w1_ref, b1_ref, w2_ref, b2_ref, w3_ref, b3_ref, o_ref):
    tb = x_ref.shape[0]
    # In-kernel bf16 cast of the activations (VPU op, hidden under the MXU).
    x = x_ref[...].astype(jnp.bfloat16)                       # (tb, 784)

    # Fused layers 1 + 2, sliced along H1 so the f32 h1 never fully exists:
    #   h2 = sum_c relu(x @ W1[:, c] + b1[c]) @ W2[c, :]
    h2 = jnp.zeros((tb, H2), jnp.float32)
    for c in range(H1 // L1_CHUNK):                           # static unroll (2)
        lo = c * L1_CHUNK
        h1c = jnp.dot(x, w1_ref[:, lo:lo + L1_CHUNK],
                      preferred_element_type=jnp.float32)      # (tb, 256) f32
        h1c = jnp.maximum(h1c + b1_ref[:, lo:lo + L1_CHUNK], 0.0)
        h2 = h2 + jnp.dot(h1c.astype(jnp.bfloat16),
                          w2_ref[lo:lo + L1_CHUNK, :],
                          preferred_element_type=jnp.float32)  # (tb, 128) f32
    h2 = jnp.maximum(h2 + b2_ref[...], 0.0)

    # Layer 3: (tb, 128) @ (128, 128)  (output cols 10..127 are zero padding)
    h3 = jnp.dot(h2.astype(jnp.bfloat16), w3_ref[...],
                 preferred_element_type=jnp.float32)
    o_ref[...] = jnp.maximum(h3 + b3_ref[...], 0.0).astype(o_ref.dtype)


def _round_up(n, m):
    return pl.cdiv(n, m) * m


@functools.partial(jax.jit, static_argnames=("tb",))
def mlp_forward(x, w1, b1, w2, b2, w3, b3, *, tb=512):
    """x: (B, 1, 28, 28) float32 (NCHW).  Returns (B, 10) float32.

    Weights are torch-layout-transposed: w_i is (in_features, out_features),
    b_i is (1, out_features), all float32.  Weight bf16 cast / padding happens
    here (tiny, one-time per call); activations go to the kernel as raw f32.
    """
    B = x.shape[0]
    x2d = x.reshape(B, D_IN)                     # view; == torch x.view(-1, 784)

    # --- adaptive batch tiling -------------------------------------------
    # Small batches: pad only to a multiple of 16 (bf16 sublane packing) and,
    # when possible, split into two tiles so v7x's two TensorCores both run.
    B16 = _round_up(B, 16)
    if B16 <= tb:
        tb = B16 // 2 if (B16 >= 32 and B16 % 32 == 0) else B16
    B_pad = _round_up(B16, tb)
    if B_pad != B:
        x2d = jnp.pad(x2d, ((0, B_pad - B), (0, 0)))

    # --- weights: bf16, lane-dense-padded last layer ----------------------
    w1p = w1.astype(jnp.bfloat16)
    w2p = w2.astype(jnp.bfloat16)
    w3p = jnp.pad(w3.astype(jnp.bfloat16), ((0, 0), (0, D_OUT_PAD - D_OUT)))
    b1p = b1.astype(jnp.float32)
    b2p = b2.astype(jnp.float32)
    b3p = jnp.pad(b3.astype(jnp.float32), ((0, 0), (0, D_OUT_PAD - D_OUT)))

    grid = (B_pad // tb,)
    full = lambda i: (0, 0)   # weights/biases: same resident block every step

    flops = 2 * B_pad * (D_IN * H1 + H1 * H2 + H2 * D_OUT_PAD)
    bytes_accessed = (
        x2d.size * 4                                    # f32 activations in
        + (w1p.size + w2p.size + w3p.size) * 2          # bf16 weights
        + (b1p.size + b2p.size + b3p.size) * 4          # f32 biases
        + B_pad * D_OUT_PAD * 2                         # bf16 output
    )

    out = pl.pallas_call(
        mlp_kernel,
        out_shape=jax.ShapeDtypeStruct((B_pad, D_OUT_PAD), jnp.bfloat16),
        grid_spec=pltpu.PrefetchScalarGridSpec(
            num_scalar_prefetch=0,
            grid=grid,
            in_specs=[
                pl.BlockSpec((tb, D_IN), lambda i: (i, 0)),   # x tile (f32)
                pl.BlockSpec((D_IN, H1), full),               # W1
                pl.BlockSpec((1, H1), full),                  # b1
                pl.BlockSpec((H1, H2), full),                 # W2
                pl.BlockSpec((1, H2), full),                  # b2
                pl.BlockSpec((H2, D_OUT_PAD), full),          # W3 (padded)
                pl.BlockSpec((1, D_OUT_PAD), full),           # b3 (padded)
            ],
            out_specs=pl.BlockSpec((tb, D_OUT_PAD), lambda i: (i, 0)),
        ),
        compiler_params=pltpu.CompilerParams(
            dimension_semantics=("parallel",),
        ),
        cost_estimate=pl.CostEstimate(
            flops=flops, transcendentals=0, bytes_accessed=bytes_accessed),
    )(x2d, w1p, b1p, w2p, b2p, w3p, b3p)

    return out[:B, :D_OUT].astype(jnp.float32)


def init_params(key):
    """Deterministic init mimicking torch.nn.Linear default
    (U[-1/sqrt(fan_in), +1/sqrt(fan_in)]).  Weights stored (in, out)."""
    dims = [(D_IN, H1), (H1, H2), (H2, D_OUT)]
    params = []
    for (fan_in, fan_out) in dims:
        key, kw, kb = jax.random.split(key, 3)
        bound = 1.0 / jnp.sqrt(float(fan_in))
        w = jax.random.uniform(kw, (fan_in, fan_out), jnp.float32, -bound, bound)
        b = jax.random.uniform(kb, (1, fan_out), jnp.float32, -bound, bound)
        params += [w, b]
    return params


def mlp_reference(x, w1, b1, w2, b2, w3, b3):
    """Pure-JAX f32 reference matching the PyTorch forward."""
    h = x.reshape(x.shape[0], -1)
    h = jnp.maximum(h @ w1 + b1, 0.0)
    h = jnp.maximum(h @ w2 + b2, 0.0)
    h = jnp.maximum(h @ w3 + b3, 0.0)
    return h


if __name__ == "__main__":
    key = jax.random.PRNGKey(0)
    key, kx = jax.random.split(key)

    # Small MNIST-like batch: (B, C, H, W) = (8, 1, 28, 28)
    x = jax.random.normal(kx, (8, 1, 28, 28), jnp.float32)
    w1, b1, w2, b2, w3, b3 = init_params(key)

    out = mlp_forward(x, w1, b1, w2, b2, w3, b3)
    out = jax.block_until_ready(out)

    ref = mlp_reference(x, w1, b1, w2, b2, w3, b3)
    assert out.shape == (8, 10)
    # bf16 weights/activations + bf16 output vs f32 reference -> loose tolerance.
    assert jnp.allclose(out, ref, atol=3e-2, rtol=3e-2), "mismatch vs reference"

    print("KERNEL_OK")
</pallas_src>

<mosaic_0001>
module attributes {stable_mosaic.version = 11 : i64} {
  func.func @mlp_kernel(%arg0: i32, %arg1: memref<16x784xf32, #tpu.memory_space<vmem>>, %arg2: memref<784x512xbf16, #tpu.memory_space<vmem>>, %arg3: memref<1x512xf32, #tpu.memory_space<vmem>>, %arg4: memref<512x128xbf16, #tpu.memory_space<vmem>>, %arg5: memref<1x128xf32, #tpu.memory_space<vmem>>, %arg6: memref<128x128xbf16, #tpu.memory_space<vmem>>, %arg7: memref<1x128xf32, #tpu.memory_space<vmem>>, %arg8: memref<16x128xbf16, #tpu.memory_space<vmem>>) attributes {dimension_semantics = [#tpu.dimension_semantics<parallel>], iteration_bounds = array<i64: 1>, scalar_prefetch = 0 : i64, scratch_operands = 0 : i64, tpu.core_type = #tpu.core_type<tc>, window_params = [{transform_indices = @transform_0, window_bounds = array<i64: 16, 784>}, {pipeline_mode = #tpu.pipeline_mode<synchronous>, transform_indices = @transform_1, window_bounds = array<i64: 784, 512>}, {pipeline_mode = #tpu.pipeline_mode<synchronous>, transform_indices = @transform_2, window_bounds = array<i64: 1, 512>}, {pipeline_mode = #tpu.pipeline_mode<synchronous>, transform_indices = @transform_3, window_bounds = array<i64: 512, 128>}, {pipeline_mode = #tpu.pipeline_mode<synchronous>, transform_indices = @transform_4, window_bounds = array<i64: 1, 128>}, {pipeline_mode = #tpu.pipeline_mode<synchronous>, transform_indices = @transform_5, window_bounds = array<i64: 128, 128>}, {pipeline_mode = #tpu.pipeline_mode<synchronous>, transform_indices = @transform_6, window_bounds = array<i64: 1, 128>}, {transform_indices = @transform_7, window_bounds = array<i64: 16, 128>}]} {
    %c0 = arith.constant 0 : index
    %c0_0 = arith.constant 0 : index
    %0 = vector.load %arg1[%c0, %c0_0] : memref<16x784xf32, #tpu.memory_space<vmem>>, vector<16x784xf32>
    %1 = arith.truncf %0 : vector<16x784xf32> to vector<16x784xbf16>
    %cst = arith.constant 0.000000e+00 : f32
    %2 = vector.broadcast %cst : f32 to vector<16x128xf32>
    %c0_1 = arith.constant 0 : index
    %c0_2 = arith.constant 0 : index
    %3 = vector.load %arg2[%c0_1, %c0_2] : memref<784x512xbf16, #tpu.memory_space<vmem>>, vector<784x256xbf16>
    %cst_3 = arith.constant dense<0.000000e+00> : vector<16x256xf32>
    %4 = tpu.matmul %1, %3, %cst_3 {dimension_numbers = #tpu.dot_dimension_numbers<[1], [0], [0], [1], [0, 0, 1, 1], [], []>} : vector<16x784xbf16>, vector<784x256xbf16>, vector<16x256xf32> -> vector<16x256xf32>
    %c0_4 = arith.constant 0 : index
    %c0_5 = arith.constant 0 : index
    %5 = vector.load %arg3[%c0_4, %c0_5] : memref<1x512xf32, #tpu.memory_space<vmem>>, vector<1x256xf32>
    %6 = vector.broadcast %5 : vector<1x256xf32> to vector<16x256xf32>
    %7 = arith.addf %4, %6 : vector<16x256xf32>
    %cst_6 = arith.constant 0.000000e+00 : f32
    %8 = vector.broadcast %cst_6 : f32 to vector<16x256xf32>
    %9 = arith.maximumf %7, %8 : vector<16x256xf32>
    %10 = arith.truncf %9 : vector<16x256xf32> to vector<16x256xbf16>
    %c0_7 = arith.constant 0 : index
    %c0_8 = arith.constant 0 : index
    %11 = vector.load %arg4[%c0_7, %c0_8] : memref<512x128xbf16, #tpu.memory_space<vmem>>, vector<256x128xbf16>
    %cst_9 = arith.constant dense<0.000000e+00> : vector<16x128xf32>
    %12 = tpu.matmul %10, %11, %cst_9 {dimension_numbers = #tpu.dot_dimension_numbers<[1], [0], [0], [1], [0, 0, 1, 1], [], []>} : vector<16x256xbf16>, vector<256x128xbf16>, vector<16x128xf32> -> vector<16x128xf32>
    %13 = arith.addf %2, %12 : vector<16x128xf32>
    %c0_10 = arith.constant 0 : index
    %c256 = arith.constant 256 : index
    %14 = vector.load %arg2[%c0_10, %c256] : memref<784x512xbf16, #tpu.memory_space<vmem>>, vector<784x256xbf16>
    %cst_11 = arith.constant dense<0.000000e+00> : vector<16x256xf32>
    %15 = tpu.matmul %1, %14, %cst_11 {dimension_numbers = #tpu.dot_dimension_numbers<[1], [0], [0], [1], [0, 0, 1, 1], [], []>} : vector<16x784xbf16>, vector<784x256xbf16>, vector<16x256xf32> -> vector<16x256xf32>
    %c0_12 = arith.constant 0 : index
    %c256_13 = arith.constant 256 : index
    %16 = vector.load %arg3[%c0_12, %c256_13] : memref<1x512xf32, #tpu.memory_space<vmem>>, vector<1x256xf32>
    %17 = vector.broadcast %16 : vector<1x256xf32> to vector<16x256xf32>
    %18 = arith.addf %15, %17 : vector<16x256xf32>
    %cst_14 = arith.constant 0.000000e+00 : f32
    %19 = vector.broadcast %cst_14 : f32 to vector<16x256xf32>
    %20 = arith.maximumf %18, %19 : vector<16x256xf32>
    %21 = arith.truncf %20 : vector<16x256xf32> to vector<16x256xbf16>
    %c256_15 = arith.constant 256 : index
    %c0_16 = arith.constant 0 : index
    %22 = vector.load %arg4[%c256_15, %c0_16] : memref<512x128xbf16, #tpu.memory_space<vmem>>, vector<256x128xbf16>
    %cst_17 = arith.constant dense<0.000000e+00> : vector<16x128xf32>
    %23 = tpu.matmul %21, %22, %cst_17 {dimension_numbers = #tpu.dot_dimension_numbers<[1], [0], [0], [1], [0, 0, 1, 1], [], []>} : vector<16x256xbf16>, vector<256x128xbf16>, vector<16x128xf32> -> vector<16x128xf32>
    %24 = arith.addf %13, %23 : vector<16x128xf32>
    %c0_18 = arith.constant 0 : index
    %c0_19 = arith.constant 0 : index
    %25 = vector.load %arg5[%c0_18, %c0_19] : memref<1x128xf32, #tpu.memory_space<vmem>>, vector<1x128xf32>
    %26 = vector.broadcast %25 : vector<1x128xf32> to vector<16x128xf32>
    %27 = arith.addf %24, %26 : vector<16x128xf32>
    %cst_20 = arith.constant 0.000000e+00 : f32
    %28 = vector.broadcast %cst_20 : f32 to vector<16x128xf32>
    %29 = arith.maximumf %27, %28 : vector<16x128xf32>
    %30 = arith.truncf %29 : vector<16x128xf32> to vector<16x128xbf16>
    %c0_21 = arith.constant 0 : index
    %c0_22 = arith.constant 0 : index
    %31 = vector.load %arg6[%c0_21, %c0_22] : memref<128x128xbf16, #tpu.memory_space<vmem>>, vector<128x128xbf16>
    %cst_23 = arith.constant dense<0.000000e+00> : vector<16x128xf32>
    %32 = tpu.matmul %30, %31, %cst_23 {dimension_numbers = #tpu.dot_dimension_numbers<[1], [0], [0], [1], [0, 0, 1, 1], [], []>} : vector<16x128xbf16>, vector<128x128xbf16>, vector<16x128xf32> -> vector<16x128xf32>
    %c0_24 = arith.constant 0 : index
    %c0_25 = arith.constant 0 : index
    %33 = vector.load %arg7[%c0_24, %c0_25] : memref<1x128xf32, #tpu.memory_space<vmem>>, vector<1x128xf32>
    %34 = vector.broadcast %33 : vector<1x128xf32> to vector<16x128xf32>
    %35 = arith.addf %32, %34 : vector<16x128xf32>
    %cst_26 = arith.constant 0.000000e+00 : f32
    %36 = vector.broadcast %cst_26 : f32 to vector<16x128xf32>
    %37 = arith.maximumf %35, %36 : vector<16x128xf32>
    %38 = arith.truncf %37 : vector<16x128xf32> to vector<16x128xbf16>
    %c0_27 = arith.constant 0 : index
    %c0_28 = arith.constant 0 : index
    %39 = vector.load %arg8[%c0_27, %c0_28] : memref<16x128xbf16, #tpu.memory_space<vmem>>, vector<16x128xbf16>
    tpu.vector_store %arg8[%c0_27, %c0_28], %38 {strides = array<i32>} : memref<16x128xbf16, #tpu.memory_space<vmem>>, vector<16x128xbf16>,
    return
  }
  func.func @transform_0(%arg0: i32) -> (i32, i32) {
    %c0_i32 = arith.constant 0 : i32
    %c0_i32_0 = arith.constant 0 : i32
    return %arg0, %c0_i32 : i32, i32
  }
  func.func @transform_1(%arg0: i32) -> (i32, i32) {
    %c0_i32 = arith.constant 0 : i32
    %c0_i32_0 = arith.constant 0 : i32
    %c0_i32_1 = arith.constant 0 : i32
    return %c0_i32, %c0_i32_0 : i32, i32
  }
  func.func @transform_2(%arg0: i32) -> (i32, i32) {
    %c0_i32 = arith.constant 0 : i32
    %c0_i32_0 = arith.constant 0 : i32
    %c0_i32_1 = arith.constant 0 : i32
    return %c0_i32, %c0_i32_0 : i32, i32
  }
  func.func @transform_3(%arg0: i32) -> (i32, i32) {
    %c0_i32 = arith.constant 0 : i32
    %c0_i32_0 = arith.constant 0 : i32
    %c0_i32_1 = arith.constant 0 : i32
    return %c0_i32, %c0_i32_0 : i32, i32
  }
  func.func @transform_4(%arg0: i32) -> (i32, i32) {
    %c0_i32 = arith.constant 0 : i32
    %c0_i32_0 = arith.constant 0 : i32
    %c0_i32_1 = arith.constant 0 : i32
    return %c0_i32, %c0_i32_0 : i32, i32
  }
  func.func @transform_5(%arg0: i32) -> (i32, i32) {
    %c0_i32 = arith.constant 0 : i32
    %c0_i32_0 = arith.constant 0 : i32
    %c0_i32_1 = arith.constant 0 : i32
    return %c0_i32, %c0_i32_0 : i32, i32
  }
  func.func @transform_6(%arg0: i32) -> (i32, i32) {
    %c0_i32 = arith.constant 0 : i32
    %c0_i32_0 = arith.constant 0 : i32
    %c0_i32_1 = arith.constant 0 : i32
    return %c0_i32, %c0_i32_0 : i32, i32
  }
  func.func @transform_7(%arg0: i32) -> (i32, i32) {
    %c0_i32 = arith.constant 0 : i32
    %c0_i32_0 = arith.constant 0 : i32
    return %arg0, %c0_i32 : i32, i32
  }
}

</mosaic_0001>

<llo_original>
// kernel: mlp_forward.1
$region0: #{mlp_forward.1}
  #allocation0 [shape = 'u32[]', space=smem, size = 0x4, offset = 0x4, fixed_abs, tag = 'smem constant byte address 0x4 - core index']
  #allocation1 [shape = 'u32[144,128]{1,0:T(1,128)}', space=vmem, size = 0x12000, scoped, tag = 'internal scratch']
  %s0 = inlined_call_operand.vmem [shape: f32[16,784], index: 0, kind: input, shape index: {}]
  %s1 = inlined_call_operand.vmem [shape: bf16[784,512], index: 1, kind: input, shape index: {}]
  %s2 = inlined_call_operand.vmem [shape: f32[1,512], index: 2, kind: input, shape index: {}]
  %s3 = inlined_call_operand.vmem [shape: bf16[512,128], index: 3, kind: input, shape index: {}]
  %s4 = inlined_call_operand.vmem [shape: f32[1,128], index: 4, kind: input, shape index: {}]
  %s5 = inlined_call_operand.vmem [shape: bf16[128,128], index: 5, kind: input, shape index: {}]
  %s6 = inlined_call_operand.vmem [shape: f32[1,128], index: 6, kind: input, shape index: {}]
  %s7 = inlined_call_operand.vmem [shape: bf16[16,128], index: 7, kind: output, shape index: {}]
  %s8 = sld [smem:[#allocation0]]
  $region38: #{mlp_forward.1} parent=0
    _
  %s10 = ssub.s32 1, %s8
  %s11 = scalar_select 0, %s10, %s8
  // Predicated region
  $region2: #{mlp_forward.1} parent=0 // pred_check
    _
  $region3: #{mlp_forward.1} parent=0 // pred_check_branch
    %13 = sbr.rel (0) target = $region5
  $region4: #{mlp_forward.1} parent=0 // pred_region
    _
  $region5: #{mlp_forward.1} parent=0 // pred_fallthru
    _
  // Predicated region
  $region6: #{mlp_forward.1} parent=0 // pred_check
    _
  $region7: #{mlp_forward.1} parent=0 // pred_check_branch
    %15 = sbr.rel (0) target = $region9
  $region8: #{mlp_forward.1} parent=0 // pred_region
    _
  $region9: #{mlp_forward.1} parent=0 // pred_fallthru
    _
  // Predicated region
  $region10: #{mlp_forward.1} parent=0 // pred_check
    _
  $region11: #{mlp_forward.1} parent=0 // pred_check_branch
    %17 = sbr.rel (0) target = $region13
  $region12: #{mlp_forward.1} parent=0 // pred_region
    _
  $region13: #{mlp_forward.1} parent=0 // pred_fallthru
    _
  // Predicated region
  $region14: #{mlp_forward.1} parent=0 // pred_check
    _
  $region15: #{mlp_forward.1} parent=0 // pred_check_branch
    %19 = sbr.rel (0) target = $region17
  $region16: #{mlp_forward.1} parent=0 // pred_region
    _
  $region17: #{mlp_forward.1} parent=0 // pred_fallthru
    _
  // Predicated region
  $region18: #{mlp_forward.1} parent=0 // pred_check
    _
  $region19: #{mlp_forward.1} parent=0 // pred_check_branch
    %21 = sbr.rel (0) target = $region21
  $region20: #{mlp_forward.1} parent=0 // pred_region
    _
  $region21: #{mlp_forward.1} parent=0 // pred_fallthru
    _
  // Predicated region
  $region22: #{mlp_forward.1} parent=0 // pred_check
    _
  $region23: #{mlp_forward.1} parent=0 // pred_check_branch
    %23 = sbr.rel (0) target = $region25
  $region24: #{mlp_forward.1} parent=0 // pred_region
    _
  $region25: #{mlp_forward.1} parent=0 // pred_fallthru
    _
  // Predicated region
  $region26: #{mlp_forward.1} parent=0 // pred_check
    _
  $region27: #{mlp_forward.1} parent=0 // pred_check_branch
    %25 = sbr.rel (0) target = $region29
  $region28: #{mlp_forward.1} parent=0 // pred_region
    _
  $region29: #{mlp_forward.1} parent=0 // pred_fallthru
    _
  %v27 = vld [vmem:[%s0] sm:$0xff]
  %v28 = vld [vmem:[%s0 + $0x8] sm:$0xff]
  %v29 = vld [vmem:[%s0 + $0x10] sm:$0xff]
  %v30 = vld [vmem:[%s0 + $0x18] sm:$0xff]
  %v31 = vld [vmem:[%s0 + $0x20] sm:$0xff]
  %v32 = vld [vmem:[%s0 + $0x28] sm:$0xff]
  %v33 = vld [vmem:[%s0 + $0x30] sm:$0xff]
  %v34 = vld [vmem:[%s0 + $0x38] sm:$0xff]
  %v35 = vld [vmem:[%s0 + $0x40] sm:$0xff]
  %v36 = vld [vmem:[%s0 + $0x48] sm:$0xff]
  %v37 = vld [vmem:[%s0 + $0x50] sm:$0xff]
  %v38 = vld [vmem:[%s0 + $0x58] sm:$0xff]
  %v39 = vld [vmem:[%s0 + $0x60] sm:$0xff]
  %v40 = vld [vmem:[%s0 + $0x68] sm:$0xff]
  %v41 = vpack.c.bf16 %v34, %v27
  %v42 = vpack.c.bf16 %v35, %v28
  %v43 = vpack.c.bf16 %v36, %v29
  %v44 = vpack.c.bf16 %v37, %v30
  %v45 = vpack.c.bf16 %v38, %v31
  %v46 = vpack.c.bf16 %v39, %v32
  %v47 = vpack.c.bf16 %v40, %v33
  %v48 = vld [vmem:[%s1] sm:$0xff]
  %v49 = vld [vmem:[%s1 + $0x10] sm:$0xff]
  %v50 = vld [vmem:[%s1 + $0x20] sm:$0xff]
  %v51 = vld [vmem:[%s1 + $0x30] sm:$0xff]
  %v52 = vld [vmem:[%s1 + $0x40] sm:$0xff]
  %v53 = vld [vmem:[%s1 + $0x50] sm:$0xff]
  %v54 = vld [vmem:[%s1 + $0x60] sm:$0xff]
  %v55 = vld [vmem:[%s1 + $0x70] sm:$0xff]
  %v56 = vld [vmem:[%s1 + $0x80] sm:$0xff]
  %v57 = vld [vmem:[%s1 + $0x90] sm:$0xff]
  %v58 = vld [vmem:[%s1 + $0xa0] sm:$0xff]
  %v59 = vld [vmem:[%s1 + $0xb0] sm:$0xff]
  %v60 = vld [vmem:[%s1 + $0xc0] sm:$0xff]
  %v61 = vld [vmem:[%s1 + $0xd0] sm:$0xff]
  %v62 = vld [vmem:[%s1 + $0xe0] sm:$0xff]
  %v63 = vld [vmem:[%s1 + $0xf0] sm:$0xff]
  %v64 = vld [vmem:[%s1 + $0x100] sm:$0xff]
  %v65 = vld [vmem:[%s1 + $0x110] sm:$0xff]
  %v66 = vld [vmem:[%s1 + $0x120] sm:$0xff]
  %v67 = vld [vmem:[%s1 + $0x130] sm:$0xff]
  %v68 = vld [vmem:[%s1 + $0x140] sm:$0xff]
  %v69 = vld [vmem:[%s1 + $0x150] sm:$0xff]
  %v70 = vld [vmem:[%s1 + $0x160] sm:$0xff]
  %v71 = vld [vmem:[%s1 + $0x170] sm:$0xff]
  %v72 = vld [vmem:[%s1 + $0x180] sm:$0xff]
  %v73 = vld [vmem:[%s1 + $0x190] sm:$0xff]
  %v74 = vld [vmem:[%s1 + $0x1a0] sm:$0xff]
  %v75 = vld [vmem:[%s1 + $0x1b0] sm:$0xff]
  %v76 = vld [vmem:[%s1 + $0x1c0] sm:$0xff]
  %v77 = vld [vmem:[%s1 + $0x1d0] sm:$0xff]
  %v78 = vld [vmem:[%s1 + $0x1e0] sm:$0xff]
  %v79 = vld [vmem:[%s1 + $0x1f0] sm:$0xff]
  %v80 = vld [vmem:[%s1 + $0x200] sm:$0xff]
  %v81 = vld [vmem:[%s1 + $0x210] sm:$0xff]
  %v82 = vld [vmem:[%s1 + $0x220] sm:$0xff]
  %v83 = vld [vmem:[%s1 + $0x230] sm:$0xff]
  %v84 = vld [vmem:[%s1 + $0x240] sm:$0xff]
  %v85 = vld [vmem:[%s1 + $0x250] sm:$0xff]
  %v86 = vld [vmem:[%s1 + $0x260] sm:$0xff]
  %v87 = vld [vmem:[%s1 + $0x270] sm:$0xff]
  %v88 = vld [vmem:[%s1 + $0x280] sm:$0xff]
  %v89 = vld [vmem:[%s1 + $0x290] sm:$0xff]
  %v90 = vld [vmem:[%s1 + $0x2a0] sm:$0xff]
  %v91 = vld [vmem:[%s1 + $0x2b0] sm:$0xff]
  %v92 = vld [vmem:[%s1 + $0x2c0] sm:$0xff]
  %v93 = vld [vmem:[%s1 + $0x2d0] sm:$0xff]
  %v94 = vld [vmem:[%s1 + $0x2e0] sm:$0xff]
  %v95 = vld [vmem:[%s1 + $0x2f0] sm:$0xff]
  %v96 = vld [vmem:[%s1 + $0x300] sm:$0xff]
  %v97 = vld [vmem:[%s1 + $0x310] sm:$0xff]
  %v98 = vld [vmem:[%s1 + $0x320] sm:$0xff]
  %v99 = vld [vmem:[%s1 + $0x330] sm:$0xff]
  %v100 = vld [vmem:[%s1 + $0x340] sm:$0xff]
  %v101 = vld [vmem:[%s1 + $0x350] sm:$0xff]
  %v102 = vld [vmem:[%s1 + $0x360] sm:$0xff]
  %v103 = vld [vmem:[%s1 + $0x370] sm:$0xff]
  %v104 = vld [vmem:[%s1 + $0x380] sm:$0xff]
  %v105 = vld [vmem:[%s1 + $0x390] sm:$0xff]
  %v106 = vld [vmem:[%s1 + $0x3a0] sm:$0xff]
  %v107 = vld [vmem:[%s1 + $0x3b0] sm:$0xff]
  %v108 = vld [vmem:[%s1 + $0x3c0] sm:$0xff]
  %v109 = vld [vmem:[%s1 + $0x3d0] sm:$0xff]
  %v110 = vld [vmem:[%s1 + $0x3e0] sm:$0xff]
  %v111 = vld [vmem:[%s1 + $0x3f0] sm:$0xff]
  %v112 = vld [vmem:[%s1 + $0x400] sm:$0xff]
  %v113 = vld [vmem:[%s1 + $0x410] sm:$0xff]
  %v114 = vld [vmem:[%s1 + $0x420] sm:$0xff]
  %v115 = vld [vmem:[%s1 + $0x430] sm:$0xff]
  %v116 = vld [vmem:[%s1 + $0x440] sm:$0xff]
  %v117 = vld [vmem:[%s1 + $0x450] sm:$0xff]
  %v118 = vld [vmem:[%s1 + $0x460] sm:$0xff]
  %v119 = vld [vmem:[%s1 + $0x470] sm:$0xff]
  %v120 = vld [vmem:[%s1 + $0x480] sm:$0xff]
  %v121 = vld [vmem:[%s1 + $0x490] sm:$0xff]
  %v122 = vld [vmem:[%s1 + $0x4a0] sm:$0xff]
  %v123 = vld [vmem:[%s1 + $0x4b0] sm:$0xff]
  %v124 = vld [vmem:[%s1 + $0x4c0] sm:$0xff]
  %v125 = vld [vmem:[%s1 + $0x4d0] sm:$0xff]
  %v126 = vld [vmem:[%s1 + $0x4e0] sm:$0xff]
  %v127 = vld [vmem:[%s1 + $0x4f0] sm:$0xff]
  %v128 = vld [vmem:[%s1 + $0x500] sm:$0xff]
  %v129 = vld [vmem:[%s1 + $0x510] sm:$0xff]
  %v130 = vld [vmem:[%s1 + $0x520] sm:$0xff]
  %v131 = vld [vmem:[%s1 + $0x530] sm:$0xff]
  %v132 = vld [vmem:[%s1 + $0x540] sm:$0xff]
  %v133 = vld [vmem:[%s1 + $0x550] sm:$0xff]
  %v134 = vld [vmem:[%s1 + $0x560] sm:$0xff]
  %v135 = vld [vmem:[%s1 + $0x570] sm:$0xff]
  %v136 = vld [vmem:[%s1 + $0x580] sm:$0xff]
  %v137 = vld [vmem:[%s1 + $0x590] sm:$0xff]
  %v138 = vld [vmem:[%s1 + $0x5a0] sm:$0xff]
  %v139 = vld [vmem:[%s1 + $0x5b0] sm:$0xff]
  %v140 = vld [vmem:[%s1 + $0x5c0] sm:$0xff]
  %v141 = vld [vmem:[%s1 + $0x5d0] sm:$0xff]
  %v142 = vld [vmem:[%s1 + $0x5e0] sm:$0xff]
  %v143 = vld [vmem:[%s1 + $0x5f0] sm:$0xff]
  %v144 = vld [vmem:[%s1 + $0x600] sm:$0xff]
  %v145 = vld [vmem:[%s1 + $0x610] sm:$0xff]
  %v146 = vld [vmem:[%s2] sm:$0x3]
  %v148 = vlaneseq
  %v149 = vshrl.u32 %v148, 7
  %v150 = vsub.s32 0, %v149
  %v151 = vrot.slane %v146, %v150
  %v152 = vlaneseq
  %v153 = vshrl.u32 %v152, 7
  %v154 = vsub.s32 1, %v153
  %v155 = vrot.slane %v146, %v154
  %v256 = vunpack.c.l.b16 %v48
  %v257 = vunpack.c.h.b16 %v48
  %v258 = vunpack.c.l.b16 %v49
  %v259 = vunpack.c.h.b16 %v49
  %v260 = vunpack.c.l.b16 %v50
  %v261 = vunpack.c.h.b16 %v50
  %v262 = vunpack.c.l.b16 %v51
  %v263 = vunpack.c.h.b16 %v51
  %v264 = vunpack.c.l.b16 %v52
  %v265 = vunpack.c.h.b16 %v52
  %v266 = vunpack.c.l.b16 %v53
  %v267 = vunpack.c.h.b16 %v53
  %v268 = vunpack.c.l.b16 %v54
  %v269 = vunpack.c.h.b16 %v54
  %v270 = vunpack.c.l.b16 %v55
  %v271 = vunpack.c.h.b16 %v55
  %v272 = vunpack.c.l.b16 %v56
  %v273 = vunpack.c.h.b16 %v56
  %v274 = vunpack.c.l.b16 %v57
  %v275 = vunpack.c.h.b16 %v57
  %v276 = vunpack.c.l.b16 %v58
  %v277 = vunpack.c.h.b16 %v58
  %v278 = vunpack.c.l.b16 %v59
  %v279 = vunpack.c.h.b16 %v59
  %v280 = vunpack.c.l.b16 %v60
  %v281 = vunpack.c.h.b16 %v60
  %v282 = vunpack.c.l.b16 %v61
  %v283 = vunpack.c.h.b16 %v61
  %v284 = vunpack.c.l.b16 %v62
  %v285 = vunpack.c.h.b16 %v62
  %v286 = vunpack.c.l.b16 %v63
  %v287 = vunpack.c.h.b16 %v63
  %v288 = vunpack.c.l.b16 %v64
  %v289 = vunpack.c.h.b16 %v64
  %v290 = vunpack.c.l.b16 %v65
  %v291 = vunpack.c.h.b16 %v65
  %v292 = vunpack.c.l.b16 %v66
  %v293 = vunpack.c.h.b16 %v66
  %v294 = vunpack.c.l.b16 %v67
  %v295 = vunpack.c.h.b16 %v67
  %v296 = vunpack.c.l.b16 %v68
  %v297 = vunpack.c.h.b16 %v68
  %v298 = vunpack.c.l.b16 %v69
  %v299 = vunpack.c.h.b16 %v69
  %v300 = vunpack.c.l.b16 %v70
  %v301 = vunpack.c.h.b16 %v70
  %v302 = vunpack.c.l.b16 %v71
  %v303 = vunpack.c.h.b16 %v71
  %v304 = vunpack.c.l.b16 %v72
  %v305 = vunpack.c.h.b16 %v72
  %v306 = vunpack.c.l.b16 %v73
  %v307 = vunpack.c.h.b16 %v73
  %v308 = vunpack.c.l.b16 %v74
  %v309 = vunpack.c.h.b16 %v74
  %v310 = vunpack.c.l.b16 %v75
  %v311 = vunpack.c.h.b16 %v75
  %v312 = vunpack.c.l.b16 %v76
  %v313 = vunpack.c.h.b16 %v76
  %v314 = vunpack.c.l.b16 %v77
  %v315 = vunpack.c.h.b16 %v77
  %v316 = vunpack.c.l.b16 %v78
  %v317 = vunpack.c.h.b16 %v78
  %v318 = vunpack.c.l.b16 %v79
  %v319 = vunpack.c.h.b16 %v79
  %v320 = vunpack.c.l.b16 %v80
  %v321 = vunpack.c.h.b16 %v80
  %v322 = vunpack.c.l.b16 %v81
  %v323 = vunpack.c.h.b16 %v81
  %v324 = vunpack.c.l.b16 %v82
  %v325 = vunpack.c.h.b16 %v82
  %v326 = vunpack.c.l.b16 %v83
  %v327 = vunpack.c.h.b16 %v83
  %v328 = vunpack.c.l.b16 %v84
  %v329 = vunpack.c.h.b16 %v84
  %v330 = vunpack.c.l.b16 %v85
  %v331 = vunpack.c.h.b16 %v85
  %v332 = vunpack.c.l.b16 %v86
  %v333 = vunpack.c.h.b16 %v86
  %v334 = vunpack.c.l.b16 %v87
  %v335 = vunpack.c.h.b16 %v87
  %v336 = vunpack.c.l.b16 %v88
  %v337 = vunpack.c.h.b16 %v88
  %v338 = vunpack.c.l.b16 %v89
  %v339 = vunpack.c.h.b16 %v89
  %v340 = vunpack.c.l.b16 %v90
  %v341 = vunpack.c.h.b16 %v90
  %v342 = vunpack.c.l.b16 %v91
  %v343 = vunpack.c.h.b16 %v91
  %v344 = vunpack.c.l.b16 %v92
  %v345 = vunpack.c.h.b16 %v92
  %v346 = vunpack.c.l.b16 %v93
  %v347 = vunpack.c.h.b16 %v93
  %v348 = vunpack.c.l.b16 %v94
  %v349 = vunpack.c.h.b16 %v94
  %v350 = vunpack.c.l.b16 %v95
  %v351 = vunpack.c.h.b16 %v95
  %v352 = vunpack.c.l.b16 %v96
  %v353 = vunpack.c.h.b16 %v96
  %v354 = vunpack.c.l.b16 %v97
  %v355 = vunpack.c.h.b16 %v97
  %v356 = vunpack.c.l.b16 %v98
  %v357 = vunpack.c.h.b16 %v98
  %v358 = vunpack.c.l.b16 %v99
  %v359 = vunpack.c.h.b16 %v99
  %v360 = vunpack.c.l.b16 %v100
  %v361 = vunpack.c.h.b16 %v100
  %v362 = vunpack.c.l.b16 %v101
  %v363 = vunpack.c.h.b16 %v101
  %v364 = vunpack.c.l.b16 %v102
  %v365 = vunpack.c.h.b16 %v102
  %v366 = vunpack.c.l.b16 %v103
  %v367 = vunpack.c.h.b16 %v103
  %v368 = vunpack.c.l.b16 %v104
  %v369 = vunpack.c.h.b16 %v104
  %v370 = vunpack.c.l.b16 %v105
  %v371 = vunpack.c.h.b16 %v105
  %v372 = vunpack.c.l.b16 %v106
  %v373 = vunpack.c.h.b16 %v106
  %v374 = vunpack.c.l.b16 %v107
  %v375 = vunpack.c.h.b16 %v107
  %v376 = vunpack.c.l.b16 %v108
  %v377 = vunpack.c.h.b16 %v108
  %v378 = vunpack.c.l.b16 %v109
  %v379 = vunpack.c.h.b16 %v109
  %v380 = vunpack.c.l.b16 %v110
  %v381 = vunpack.c.h.b16 %v110
  %v382 = vunpack.c.l.b16 %v111
  %v383 = vunpack.c.h.b16 %v111
  %v384 = vunpack.c.l.b16 %v112
  %v385 = vunpack.c.h.b16 %v112
  %v386 = vunpack.c.l.b16 %v113
  %v387 = vunpack.c.h.b16 %v113
  %v388 = vunpack.c.l.b16 %v114
  %v389 = vunpack.c.h.b16 %v114
  %v390 = vunpack.c.l.b16 %v115
  %v391 = vunpack.c.h.b16 %v115
  %v392 = vunpack.c.l.b16 %v116
  %v393 = vunpack.c.h.b16 %v116
  %v394 = vunpack.c.l.b16 %v117
  %v395 = vunpack.c.h.b16 %v117
  %v396 = vunpack.c.l.b16 %v118
  %v397 = vunpack.c.h.b16 %v118
  %v398 = vunpack.c.l.b16 %v119
  %v399 = vunpack.c.h.b16 %v119
  %v400 = vunpack.c.l.b16 %v120
  %v401 = vunpack.c.h.b16 %v120
  %v402 = vunpack.c.l.b16 %v121
  %v403 = vunpack.c.h.b16 %v121
  %v404 = vunpack.c.l.b16 %v122
  %v405 = vunpack.c.h.b16 %v122
  %v406 = vunpack.c.l.b16 %v123
  %v407 = vunpack.c.h.b16 %v123
  %v408 = vunpack.c.l.b16 %v124
  %v409 = vunpack.c.h.b16 %v124
  %v410 = vunpack.c.l.b16 %v125
  %v411 = vunpack.c.h.b16 %v125
  %v412 = vunpack.c.l.b16 %v126
  %v413 = vunpack.c.h.b16 %v126
  %v414 = vunpack.c.l.b16 %v127
  %v415 = vunpack.c.h.b16 %v127
  %v416 = vunpack.c.l.b16 %v128
  %v417 = vunpack.c.h.b16 %v128
  %v418 = vunpack.c.l.b16 %v129
  %v419 = vunpack.c.h.b16 %v129
  %v420 = vunpack.c.l.b16 %v130
  %v421 = vunpack.c.h.b16 %v130
  %v422 = vunpack.c.l.b16 %v131
  %v423 = vunpack.c.h.b16 %v131
  %v424 = vunpack.c.l.b16 %v132
  %v425 = vunpack.c.h.b16 %v132
  %v426 = vunpack.c.l.b16 %v133
  %v427 = vunpack.c.h.b16 %v133
  %v428 = vunpack.c.l.b16 %v134
  %v429 = vunpack.c.h.b16 %v134
  %v430 = vunpack.c.l.b16 %v135
  %v431 = vunpack.c.h.b16 %v135
  %v432 = vunpack.c.l.b16 %v136
  %v433 = vunpack.c.h.b16 %v136
  %v434 = vunpack.c.l.b16 %v137
  %v435 = vunpack.c.h.b16 %v137
  %v436 = vunpack.c.l.b16 %v138
  %v437 = vunpack.c.h.b16 %v138
  %v438 = vunpack.c.l.b16 %v139
  %v439 = vunpack.c.h.b16 %v139
  %v440 = vunpack.c.l.b16 %v140
  %v441 = vunpack.c.h.b16 %v140
  %v442 = vunpack.c.l.b16 %v141
  %v443 = vunpack.c.h.b16 %v141
  %v444 = vunpack.c.l.b16 %v142
  %v445 = vunpack.c.h.b16 %v142
  %v446 = vunpack.c.l.b16 %v143
  %v447 = vunpack.c.h.b16 %v143
  %v448 = vunpack.c.l.b16 %v144
  %v449 = vunpack.c.h.b16 %v144
  %v450 = vunpack.c.l.b16 %v145
  %v451 = vunpack.c.h.b16 %v145
  %v452 = vpack.c.b16 %v258, %v256
  %v453 = vpack.c.b16 %v259, %v257
  %v454 = vpack.c.b16 %v262, %v260
  %v455 = vpack.c.b16 %v263, %v261
  %v456 = vpack.c.b16 %v266, %v264
  %v457 = vpack.c.b16 %v267, %v265
  %v458 = vpack.c.b16 %v270, %v268
  %v459 = vpack.c.b16 %v271, %v269
  %v460 = vpack.c.b16 %v274, %v272
  %v461 = vpack.c.b16 %v275, %v273
  %v462 = vpack.c.b16 %v278, %v276
  %v463 = vpack.c.b16 %v279, %v277
  %v464 = vpack.c.b16 %v282, %v280
  %v465 = vpack.c.b16 %v283, %v281
  %v466 = vpack.c.b16 %v286, %v284
  %v467 = vpack.c.b16 %v287, %v285
  %v468 = vpack.c.b16 %v290, %v288
  %v469 = vpack.c.b16 %v291, %v289
  %v470 = vpack.c.b16 %v294, %v292
  %v471 = vpack.c.b16 %v295, %v293
  %v472 = vpack.c.b16 %v298, %v296
  %v473 = vpack.c.b16 %v299, %v297
  %v474 = vpack.c.b16 %v302, %v300
  %v475 = vpack.c.b16 %v303, %v301
  %v476 = vpack.c.b16 %v306, %v304
  %v477 = vpack.c.b16 %v307, %v305
  %v478 = vpack.c.b16 %v310, %v308
  %v479 = vpack.c.b16 %v311, %v309
  %v480 = vpack.c.b16 %v314, %v312
  %v481 = vpack.c.b16 %v315, %v313
  %v482 = vpack.c.b16 %v318, %v316
  %v483 = vpack.c.b16 %v319, %v317
  %v484 = vpack.c.b16 %v322, %v320
  %v485 = vpack.c.b16 %v323, %v321
  %v486 = vpack.c.b16 %v326, %v324
  %v487 = vpack.c.b16 %v327, %v325
  %v488 = vpack.c.b16 %v330, %v328
  %v489 = vpack.c.b16 %v331, %v329
  %v490 = vpack.c.b16 %v334, %v332
  %v491 = vpack.c.b16 %v335, %v333
  %v492 = vpack.c.b16 %v338, %v336
  %v493 = vpack.c.b16 %v339, %v337
  %v494 = vpack.c.b16 %v342, %v340
  %v495 = vpack.c.b16 %v343, %v341
  %v496 = vpack.c.b16 %v346, %v344
  %v497 = vpack.c.b16 %v347, %v345
  %v498 = vpack.c.b16 %v350, %v348
  %v499 = vpack.c.b16 %v351, %v349
  %v500 = vpack.c.b16 %v354, %v352
  %v501 = vpack.c.b16 %v355, %v353
  %v502 = vpack.c.b16 %v358, %v356
  %v503 = vpack.c.b16 %v359, %v357
  %v504 = vpack.c.b16 %v362, %v360
  %v505 = vpack.c.b16 %v363, %v361
  %v506 = vpack.c.b16 %v366, %v364
  %v507 = vpack.c.b16 %v367, %v365
  %v508 = vpack.c.b16 %v370, %v368
  %v509 = vpack.c.b16 %v371, %v369
  %v510 = vpack.c.b16 %v374, %v372
  %v511 = vpack.c.b16 %v375, %v373
  %v512 = vpack.c.b16 %v378, %v376
  %v513 = vpack.c.b16 %v379, %v377
  %v514 = vpack.c.b16 %v382, %v380
  %v515 = vpack.c.b16 %v383, %v381
  %v516 = vpack.c.b16 %v386, %v384
  %v517 = vpack.c.b16 %v387, %v385
  %v518 = vpack.c.b16 %v390, %v388
  %v519 = vpack.c.b16 %v391, %v389
  %v520 = vpack.c.b16 %v394, %v392
  %v521 = vpack.c.b16 %v395, %v393
  %v522 = vpack.c.b16 %v398, %v396
  %v523 = vpack.c.b16 %v399, %v397
  %v524 = vpack.c.b16 %v402, %v400
  %v525 = vpack.c.b16 %v403, %v401
  %v526 = vpack.c.b16 %v406, %v404
  %v527 = vpack.c.b16 %v407, %v405
  %v528 = vpack.c.b16 %v410, %v408
  %v529 = vpack.c.b16 %v411, %v409
  %v530 = vpack.c.b16 %v414, %v412
  %v531 = vpack.c.b16 %v415, %v413
  %v532 = vpack.c.b16 %v418, %v416
  %v533 = vpack.c.b16 %v419, %v417
  %v534 = vpack.c.b16 %v422, %v420
  %v535 = vpack.c.b16 %v423, %v421
  %v536 = vpack.c.b16 %v426, %v424
  %v537 = vpack.c.b16 %v427, %v425
  %v538 = vpack.c.b16 %v430, %v428
  %v539 = vpack.c.b16 %v431, %v429
  %v540 = vpack.c.b16 %v434, %v432
  %v541 = vpack.c.b16 %v435, %v433
  %v542 = vpack.c.b16 %v438, %v436
  %v543 = vpack.c.b16 %v439, %v437
  %v544 = vpack.c.b16 %v442, %v440
  %v545 = vpack.c.b16 %v443, %v441
  %v546 = vpack.c.b16 %v446, %v444
  %v547 = vpack.c.b16 %v447, %v445
  %v548 = vpack.c.b16 %v450, %v448
  %v549 = vpack.c.b16 %v451, %v449
  %vm648 = vcmask 130048
  %v650 = vsel %vm648, %v47, 0
  %652 = vmatprep.subr.bf16.mxu0 %v453
  %653 = vmatpush1.bf16.msra.mxu0 %v452
  %654 = vmatprep.subr.bf16.mxu0 %v455
  %655 = vmatpush1.bf16.msra.mxu0 %v454
  %656 = vmatprep.subr.bf16.mxu0 %v457
  %657 = vmatpush1.bf16.msra.mxu0 %v456
  %658 = vmatprep.subr.bf16.mxu0 %v459
  %659 = vmatpush1.bf16.msra.mxu0 %v458
  %660 = vmatprep.subr.bf16.mxu0 %v461
  %661 = vmatpush1.bf16.msra.mxu0 %v460
  %662 = vmatprep.subr.bf16.mxu0 %v463
  %663 = vmatpush1.bf16.msra.mxu0 %v462
  %664 = vmatprep.subr.bf16.mxu0 %v465
  %665 = vmatpush1.bf16.msra.mxu0 %v464
  %666 = vmatprep.subr.bf16.mxu0 %v467
  %667 = vmatpush1.bf16.msra.mxu0 %v466
  %668 = vmatprep.subr.bf16.mxu0 %v469
  %669 = vmatpush1.bf16.msra.mxu0 %v468
  %670 = vmatprep.subr.bf16.mxu0 %v471
  %671 = vmatpush1.bf16.msra.mxu0 %v470
  %672 = vmatprep.subr.bf16.mxu0 %v473
  %673 = vmatpush1.bf16.msra.mxu0 %v472
  %674 = vmatprep.subr.bf16.mxu0 %v475
  %675 = vmatpush1.bf16.msra.mxu0 %v474
  %676 = vmatprep.subr.bf16.mxu0 %v477
  %677 = vmatpush1.bf16.msra.mxu0 %v476
  %678 = vmatprep.subr.bf16.mxu0 %v479
  %679 = vmatpush1.bf16.msra.mxu0 %v478
  %680 = vmatprep.subr.bf16.mxu0 %v481
  %681 = vmatpush1.bf16.msra.mxu0 %v480
  %682 = vmatprep.subr.bf16.mxu0 %v483
  %683 = vmatpush1.bf16.msra.mxu0 %v482
  %684 = vmatprep.mubr.bf16.mxu0 %v42
  %685 = vmatmul.mubr.bf16.gmra.mrb[0].mxu0 %v41
  %v686 = vpop.f32.mrb[0].mxu0
  %v687 = vadd.f32 %v151, %v686
  %v688 = vpop.f32.mrb[0].mxu0
  %v689 = vadd.f32 %v155, %v688
  %v690 = vpop.f32.mrb[0].mxu0
  %v691 = vadd.f32 %v151, %v690
  %v692 = vpop.f32.mrb[0].mxu0
  %v693 = vadd.f32 %v155, %v692
  %694 = vdwg.mxu0
  %695 = vmatprep.subr.bf16.mxu0 %v485
  %696 = vmatpush1.bf16.msra.mxu0 %v484
  %697 = vmatprep.subr.bf16.mxu0 %v487
  %698 = vmatpush1.bf16.msra.mxu0 %v486
  %699 = vmatprep.subr.bf16.mxu0 %v489
  %700 = vmatpush1.bf16.msra.mxu0 %v488
  %701 = vmatprep.subr.bf16.mxu0 %v491
  %702 = vmatpush1.bf16.msra.mxu0 %v490
  %703 = vmatprep.subr.bf16.mxu0 %v493
  %704 = vmatpush1.bf16.msra.mxu0 %v492
  %705 = vmatprep.subr.bf16.mxu0 %v495
  %706 = vmatpush1.bf16.msra.mxu0 %v494
  %707 = vmatprep.subr.bf16.mxu0 %v497
  %708 = vmatpush1.bf16.msra.mxu0 %v496
  %709 = vmatprep.subr.bf16.mxu0 %v499
  %710 = vmatpush1.bf16.msra.mxu0 %v498
  %711 = vmatprep.subr.bf16.mxu0 %v501
  %712 = vmatpush1.bf16.msra.mxu0 %v500
  %713 = vmatprep.subr.bf16.mxu0 %v503
  %714 = vmatpush1.bf16.msra.mxu0 %v502
  %715 = vmatprep.subr.bf16.mxu0 %v505
  %716 = vmatpush1.bf16.msra.mxu0 %v504
  %717 = vmatprep.subr.bf16.mxu0 %v507
  %718 = vmatpush1.bf16.msra.mxu0 %v506
  %719 = vmatprep.subr.bf16.mxu0 %v509
  %720 = vmatpush1.bf16.msra.mxu0 %v508
  %721 = vmatprep.subr.bf16.mxu0 %v511
  %722 = vmatpush1.bf16.msra.mxu0 %v510
  %723 = vmatprep.subr.bf16.mxu0 %v513
  %724 = vmatpush1.bf16.msra.mxu0 %v512
  %725 = vmatprep.subr.bf16.mxu0 %v515
  %726 = vmatpush1.bf16.msra.mxu0 %v514
  %727 = vmatprep.mubr.bf16.mxu0 %v44
  %728 = vmatmul.mubr.bf16.gmra.mrb[0].mxu0 %v43
  %v729 = vpop.f32.mrb[0].mxu0
  %v730 = vadd.f32 %v687, %v729
  %v731 = vpop.f32.mrb[0].mxu0
  %v732 = vadd.f32 %v689, %v731
  %v733 = vpop.f32.mrb[0].mxu0
  %v734 = vadd.f32 %v691, %v733
  %v735 = vpop.f32.mrb[0].mxu0
  %v736 = vadd.f32 %v693, %v735
  %737 = vdwg.mxu0
  %738 = vmatprep.subr.bf16.mxu0 %v517
  %739 = vmatpush1.bf16.msra.mxu0 %v516
  %740 = vmatprep.subr.bf16.mxu0 %v519
  %741 = vmatpush1.bf16.msra.mxu0 %v518
  %742 = vmatprep.subr.bf16.mxu0 %v521
  %743 = vmatpush1.bf16.msra.mxu0 %v520
  %744 = vmatprep.subr.bf16.mxu0 %v523
  %745 = vmatpush1.bf16.msra.mxu0 %v522
  %746 = vmatprep.subr.bf16.mxu0 %v525
  %747 = vmatpush1.bf16.msra.mxu0 %v524
  %748 = vmatprep.subr.bf16.mxu0 %v527
  %749 = vmatpush1.bf16.msra.mxu0 %v526
  %750 = vmatprep.subr.bf16.mxu0 %v529
  %751 = vmatpush1.bf16.msra.mxu0 %v528
  %752 = vmatprep.subr.bf16.mxu0 %v531
  %753 = vmatpush1.bf16.msra.mxu0 %v530
  %754 = vmatprep.subr.bf16.mxu0 %v533
  %755 = vmatpush1.bf16.msra.mxu0 %v532
  %756 = vmatprep.subr.bf16.mxu0 %v535
  %757 = vmatpush1.bf16.msra.mxu0 %v534
  %758 = vmatprep.subr.bf16.mxu0 %v537
  %759 = vmatpush1.bf16.msra.mxu0 %v536
  %760 = vmatprep.subr.bf16.mxu0 %v539
  %761 = vmatpush1.bf16.msra.mxu0 %v538
  %762 = vmatprep.subr.bf16.mxu0 %v541
  %763 = vmatpush1.bf16.msra.mxu0 %v540
  %764 = vmatprep.subr.bf16.mxu0 %v543
  %765 = vmatpush1.bf16.msra.mxu0 %v542
  %766 = vmatprep.subr.bf16.mxu0 %v545
  %767 = vmatpush1.bf16.msra.mxu0 %v544
  %768 = vmatprep.subr.bf16.mxu0 %v547
  %769 = vmatpush1.bf16.msra.mxu0 %v546
  %770 = vmatprep.mubr.bf16.mxu0 %v46
  %771 = vmatmul.mubr.bf16.gmra.mrb[0].mxu0 %v45
  %v772 = vpop.f32.mrb[0].mxu0
  %v773 = vadd.f32 %v730, %v772
  %v774 = vpop.f32.mrb[0].mxu0
  %v775 = vadd.f32 %v732, %v774
  %v776 = vpop.f32.mrb[0].mxu0
  %v777 = vadd.f32 %v734, %v776
  %v778 = vpop.f32.mrb[0].mxu0
  %v779 = vadd.f32 %v736, %v778
  %780 = vdwg.mxu0
  %781 = vmatprep.subr.bf16.mxu0 %v549
  %782 = vmatpush1.bf16.msra.mxu0 %v548
  %783 = vmatprep.subr.bf16.mxu0 0
  %784 = vmatpush1.bf16.msra.mxu0 0
  %785 = vmatprep.subr.bf16.mxu0 0
  %786 = vmatpush1.bf16.msra.mxu0 0
  %787 = vmatprep.subr.bf16.mxu0 0
  %788 = vmatpush1.bf16.msra.mxu0 0
  %789 = vmatprep.subr.bf16.mxu0 0
  %790 = vmatpush1.bf16.msra.mxu0 0
  %791 = vmatprep.subr.bf16.mxu0 0
  %792 = vmatpush1.bf16.msra.mxu0 0
  %793 = vmatprep.subr.bf16.mxu0 0
  %794 = vmatpush1.bf16.msra.mxu0 0
  %795 = vmatprep.subr.bf16.mxu0 0
  %796 = vmatpush1.bf16.msra.mxu0 0
  %797 = vmatprep.subr.bf16.mxu0 0
  %798 = vmatpush1.bf16.msra.mxu0 0
  %799 = vmatprep.subr.bf16.mxu0 0
  %800 = vmatpush1.bf16.msra.mxu0 0
  %801 = vmatprep.subr.bf16.mxu0 0
  %802 = vmatpush1.bf16.msra.mxu0 0
  %803 = vmatprep.subr.bf16.mxu0 0
  %804 = vmatpush1.bf16.msra.mxu0 0
  %805 = vmatprep.subr.bf16.mxu0 0
  %806 = vmatpush1.bf16.msra.mxu0 0
  %807 = vmatprep.subr.bf16.mxu0 0
  %808 = vmatpush1.bf16.msra.mxu0 0
  %809 = vmatprep.subr.bf16.mxu0 0
  %810 = vmatpush1.bf16.msra.mxu0 0
  %811 = vmatprep.subr.bf16.mxu0 0
  %812 = vmatpush1.bf16.msra.mxu0 0
  %813 = vmatprep.mubr.bf16.mxu0 0
  %814 = vmatmul.mubr.bf16.gmra.mrb[0].mxu0 %v650
  %v815 = vpop.f32.mrb[0].mxu0
  %v816 = vadd.f32 %v773, %v815
  %v817 = vpop.f32.mrb[0].mxu0
  %v818 = vadd.f32 %v775, %v817
  %v819 = vpop.f32.mrb[0].mxu0
  %v820 = vadd.f32 %v777, %v819
  %v821 = vpop.f32.mrb[0].mxu0
  %v822 = vadd.f32 %v779, %v821
  %823 = vdwg.mxu0
  %v824 = vmax.f32 %v816, 0.0
  %v825 = vmax.f32 %v818, 0.0
  %v826 = vmax.f32 %v820, 0.0
  %v827 = vmax.f32 %v822, 0.0
  %v828 = vpack.c.bf16 %v826, %v824
  %v829 = vpack.c.bf16 %v827, %v825
  %v830 = vld [vmem:[%s3] sm:$0xf]
  %v831 = vld [vmem:[%s3 + $0x4] sm:$0xf]
  %v832 = vld [vmem:[%s3 + $0x8] sm:$0xf]
  %v833 = vld [vmem:[%s3 + $0xc] sm:$0xf]
  %v834 = vld [vmem:[%s3 + $0x10] sm:$0xf]
  %v835 = vld [vmem:[%s3 + $0x14] sm:$0xf]
  %v836 = vld [vmem:[%s3 + $0x18] sm:$0xf]
  %v837 = vld [vmem:[%s3 + $0x1c] sm:$0xf]
  %v838 = vld [vmem:[%s3 + $0x20] sm:$0xf]
  %v839 = vld [vmem:[%s3 + $0x24] sm:$0xf]
  %v840 = vld [vmem:[%s3 + $0x28] sm:$0xf]
  %v841 = vld [vmem:[%s3 + $0x2c] sm:$0xf]
  %v842 = vld [vmem:[%s3 + $0x30] sm:$0xf]
  %v843 = vld [vmem:[%s3 + $0x34] sm:$0xf]
  %v844 = vld [vmem:[%s3 + $0x38] sm:$0xf]
  %v845 = vld [vmem:[%s3 + $0x3c] sm:$0xf]
  %v846 = vld [vmem:[%s3 + $0x40] sm:$0xf]
  %v847 = vld [vmem:[%s3 + $0x44] sm:$0xf]
  %v848 = vld [vmem:[%s3 + $0x48] sm:$0xf]
  %v849 = vld [vmem:[%s3 + $0x4c] sm:$0xf]
  %v850 = vld [vmem:[%s3 + $0x50] sm:$0xf]
  %v851 = vld [vmem:[%s3 + $0x54] sm:$0xf]
  %v852 = vld [vmem:[%s3 + $0x58] sm:$0xf]
  %v853 = vld [vmem:[%s3 + $0x5c] sm:$0xf]
  %v854 = vld [vmem:[%s3 + $0x60] sm:$0xf]
  %v855 = vld [vmem:[%s3 + $0x64] sm:$0xf]
  %v856 = vld [vmem:[%s3 + $0x68] sm:$0xf]
  %v857 = vld [vmem:[%s3 + $0x6c] sm:$0xf]
  %v858 = vld [vmem:[%s3 + $0x70] sm:$0xf]
  %v859 = vld [vmem:[%s3 + $0x74] sm:$0xf]
  %v860 = vld [vmem:[%s3 + $0x78] sm:$0xf]
  %v861 = vld [vmem:[%s3 + $0x7c] sm:$0xf]
  %v862 = vld [vmem:[%s1 + $0x8] sm:$0xff]
  %v863 = vld [vmem:[%s1 + $0x18] sm:$0xff]
  %v864 = vld [vmem:[%s1 + $0x28] sm:$0xff]
  %v865 = vld [vmem:[%s1 + $0x38] sm:$0xff]
  %v866 = vld [vmem:[%s1 + $0x48] sm:$0xff]
  %v867 = vld [vmem:[%s1 + $0x58] sm:$0xff]
  %v868 = vld [vmem:[%s1 + $0x68] sm:$0xff]
  %v869 = vld [vmem:[%s1 + $0x78] sm:$0xff]
  %v870 = vld [vmem:[%s1 + $0x88] sm:$0xff]
  %v871 = vld [vmem:[%s1 + $0x98] sm:$0xff]
  %v872 = vld [vmem:[%s1 + $0xa8] sm:$0xff]
  %v873 = vld [vmem:[%s1 + $0xb8] sm:$0xff]
  %v874 = vld [vmem:[%s1 + $0xc8] sm:$0xff]
  %v875 = vld [vmem:[%s1 + $0xd8] sm:$0xff]
  %v876 = vld [vmem:[%s1 + $0xe8] sm:$0xff]
  %v877 = vld [vmem:[%s1 + $0xf8] sm:$0xff]
  %v878 = vld [vmem:[%s1 + $0x108] sm:$0xff]
  %v879 = vld [vmem:[%s1 + $0x118] sm:$0xff]
  %v880 = vld [vmem:[%s1 + $0x128] sm:$0xff]
  %v881 = vld [vmem:[%s1 + $0x138] sm:$0xff]
  %v882 = vld [vmem:[%s1 + $0x148] sm:$0xff]
  %v883 = vld [vmem:[%s1 + $0x158] sm:$0xff]
  %v884 = vld [vmem:[%s1 + $0x168] sm:$0xff]
  %v885 = vld [vmem:[%s1 + $0x178] sm:$0xff]
  %v886 = vld [vmem:[%s1 + $0x188] sm:$0xff]
  %v887 = vld [vmem:[%s1 + $0x198] sm:$0xff]
  %v888 = vld [vmem:[%s1 + $0x1a8] sm:$0xff]
  %v889 = vld [vmem:[%s1 + $0x1b8] sm:$0xff]
  %v890 = vld [vmem:[%s1 + $0x1c8] sm:$0xff]
  %v891 = vld [vmem:[%s1 + $0x1d8] sm:$0xff]
  %v892 = vld [vmem:[%s1 + $0x1e8] sm:$0xff]
  %v893 = vld [vmem:[%s1 + $0x1f8] sm:$0xff]
  %v894 = vld [vmem:[%s1 + $0x208] sm:$0xff]
  %v895 = vld [vmem:[%s1 + $0x218] sm:$0xff]
  %v896 = vld [vmem:[%s1 + $0x228] sm:$0xff]
  %v897 = vld [vmem:[%s1 + $0x238] sm:$0xff]
  %v898 = vld [vmem:[%s1 + $0x248] sm:$0xff]
  %v899 = vld [vmem:[%s1 + $0x258] sm:$0xff]
  %v900 = vld [vmem:[%s1 + $0x268] sm:$0xff]
  %v901 = vld [vmem:[%s1 + $0x278] sm:$0xff]
  %v902 = vld [vmem:[%s1 + $0x288] sm:$0xff]
  %v903 = vld [vmem:[%s1 + $0x298] sm:$0xff]
  %v904 = vld [vmem:[%s1 + $0x2a8] sm:$0xff]
  %v905 = vld [vmem:[%s1 + $0x2b8] sm:$0xff]
  %v906 = vld [vmem:[%s1 + $0x2c8] sm:$0xff]
  %v907 = vld [vmem:[%s1 + $0x2d8] sm:$0xff]
  %v908 = vld [vmem:[%s1 + $0x2e8] sm:$0xff]
  %v909 = vld [vmem:[%s1 + $0x2f8] sm:$0xff]
  %v910 = vld [vmem:[%s1 + $0x308] sm:$0xff]
  %v911 = vld [vmem:[%s1 + $0x318] sm:$0xff]
  %v912 = vld [vmem:[%s1 + $0x328] sm:$0xff]
  %v913 = vld [vmem:[%s1 + $0x338] sm:$0xff]
  %v914 = vld [vmem:[%s1 + $0x348] sm:$0xff]
  %v915 = vld [vmem:[%s1 + $0x358] sm:$0xff]
  %v916 = vld [vmem:[%s1 + $0x368] sm:$0xff]
  %v917 = vld [vmem:[%s1 + $0x378] sm:$0xff]
  %v918 = vld [vmem:[%s1 + $0x388] sm:$0xff]
  %v919 = vld [vmem:[%s1 + $0x398] sm:$0xff]
  %v920 = vld [vmem:[%s1 + $0x3a8] sm:$0xff]
  %v921 = vld [vmem:[%s1 + $0x3b8] sm:$0xff]
  %v922 = vld [vmem:[%s1 + $0x3c8] sm:$0xff]
  %v923 = vld [vmem:[%s1 + $0x3d8] sm:$0xff]
  %v924 = vld [vmem:[%s1 + $0x3e8] sm:$0xff]
  %v925 = vld [vmem:[%s1 + $0x3f8] sm:$0xff]
  %v926 = vld [vmem:[%s1 + $0x408] sm:$0xff]
  %v927 = vld [vmem:[%s1 + $0x418] sm:$0xff]
  %v928 = vld [vmem:[%s1 + $0x428] sm:$0xff]
  %v929 = vld [vmem:[%s1 + $0x438] sm:$0xff]
  %v930 = vld [vmem:[%s1 + $0x448] sm:$0xff]
  %v931 = vld [vmem:[%s1 + $0x458] sm:$0xff]
  %v932 = vld [vmem:[%s1 + $0x468] sm:$0xff]
  %v933 = vld [vmem:[%s1 + $0x478] sm:$0xff]
  %v934 = vld [vmem:[%s1 + $0x488] sm:$0xff]
  %v935 = vld [vmem:[%s1 + $0x498] sm:$0xff]
  %v936 = vld [vmem:[%s1 + $0x4a8] sm:$0xff]
  %v937 = vld [vmem:[%s1 + $0x4b8] sm:$0xff]
  %v938 = vld [vmem:[%s1 + $0x4c8] sm:$0xff]
  %v939 = vld [vmem:[%s1 + $0x4d8] sm:$0xff]
  %v940 = vld [vmem:[%s1 + $0x4e8] sm:$0xff]
  %v941 = vld [vmem:[%s1 + $0x4f8] sm:$0xff]
  %v942 = vld [vmem:[%s1 + $0x508] sm:$0xff]
  %v943 = vld [vmem:[%s1 + $0x518] sm:$0xff]
  %v944 = vld [vmem:[%s1 + $0x528] sm:$0xff]
  %v945 = vld [vmem:[%s1 + $0x538] sm:$0xff]
  %v946 = vld [vmem:[%s1 + $0x548] sm:$0xff]
  %v947 = vld [vmem:[%s1 + $0x558] sm:$0xff]
  %v948 = vld [vmem:[%s1 + $0x568] sm:$0xff]
  %v949 = vld [vmem:[%s1 + $0x578] sm:$0xff]
  %v950 = vld [vmem:[%s1 + $0x588] sm:$0xff]
  %v951 = vld [vmem:[%s1 + $0x598] sm:$0xff]
  %v952 = vld [vmem:[%s1 + $0x5a8] sm:$0xff]
  %v953 = vld [vmem:[%s1 + $0x5b8] sm:$0xff]
  %v954 = vld [vmem:[%s1 + $0x5c8] sm:$0xff]
  %v955 = vld [vmem:[%s1 + $0x5d8] sm:$0xff]
  %v956 = vld [vmem:[%s1 + $0x5e8] sm:$0xff]
  %v957 = vld [vmem:[%s1 + $0x5f8] sm:$0xff]
  %v958 = vld [vmem:[%s1 + $0x608] sm:$0xff]
  %v959 = vld [vmem:[%s1 + $0x618] sm:$0xff]
  %v960 = vld [vmem:[%s2 + $0x2] sm:$0x3]
  %v962 = vlaneseq
  %v963 = vshrl.u32 %v962, 7
  %v964 = vsub.s32 0, %v963
  %v965 = vrot.slane %v960, %v964
  %v966 = vlaneseq
  %v967 = vshrl.u32 %v966, 7
  %v968 = vsub.s32 1, %v967
  %v969 = vrot.slane %v960, %v968
  %v1070 = vunpack.c.l.b16 %v862
  %v1071 = vunpack.c.h.b16 %v862
  %v1072 = vunpack.c.l.b16 %v863
  %v1073 = vunpack.c.h.b16 %v863
  %v1074 = vunpack.c.l.b16 %v864
  %v1075 = vunpack.c.h.b16 %v864
  %v1076 = vunpack.c.l.b16 %v865
  %v1077 = vunpack.c.h.b16 %v865
  %v1078 = vunpack.c.l.b16 %v866
  %v1079 = vunpack.c.h.b16 %v866
  %v1080 = vunpack.c.l.b16 %v867
  %v1081 = vunpack.c.h.b16 %v867
  %v1082 = vunpack.c.l.b16 %v868
  %v1083 = vunpack.c.h.b16 %v868
  %v1084 = vunpack.c.l.b16 %v869
  %v1085 = vunpack.c.h.b16 %v869
  %v1086 = vunpack.c.l.b16 %v870
  %v1087 = vunpack.c.h.b16 %v870
  %v1088 = vunpack.c.l.b16 %v871
  %v1089 = vunpack.c.h.b16 %v871
  %v1090 = vunpack.c.l.b16 %v872
  %v1091 = vunpack.c.h.b16 %v872
  %v1092 = vunpack.c.l.b16 %v873
  %v1093 = vunpack.c.h.b16 %v873
  %v1094 = vunpack.c.l.b16 %v874
  %v1095 = vunpack.c.h.b16 %v874
  %v1096 = vunpack.c.l.b16 %v875
  %v1097 = vunpack.c.h.b16 %v875
  %v1098 = vunpack.c.l.b16 %v876
  %v1099 = vunpack.c.h.b16 %v876
  %v1100 = vunpack.c.l.b16 %v877
  %v1101 = vunpack.c.h.b16 %v877
  %v1102 = vunpack.c.l.b16 %v878
  %v1103 = vunpack.c.h.b16 %v878
  %v1104 = vunpack.c.l.b16 %v879
  %v1105 = vunpack.c.h.b16 %v879
  %v1106 = vunpack.c.l.b16 %v880
  %v1107 = vunpack.c.h.b16 %v880
  %v1108 = vunpack.c.l.b16 %v881
  %v1109 = vunpack.c.h.b16 %v881
  %v1110 = vunpack.c.l.b16 %v882
  %v1111 = vunpack.c.h.b16 %v882
  %v1112 = vunpack.c.l.b16 %v883
  %v1113 = vunpack.c.h.b16 %v883
  %v1114 = vunpack.c.l.b16 %v884
  %v1115 = vunpack.c.h.b16 %v884
  %v1116 = vunpack.c.l.b16 %v885
  %v1117 = vunpack.c.h.b16 %v885
  %v1118 = vunpack.c.l.b16 %v886
  %v1119 = vunpack.c.h.b16 %v886
  %v1120 = vunpack.c.l.b16 %v887
  %v1121 = vunpack.c.h.b16 %v887
  %v1122 = vunpack.c.l.b16 %v888
  %v1123 = vunpack.c.h.b16 %v888
  %v1124 = vunpack.c.l.b16 %v889
  %v1125 = vunpack.c.h.b16 %v889
  %v1126 = vunpack.c.l.b16 %v890
  %v1127 = vunpack.c.h.b16 %v890
  %v1128 = vunpack.c.l.b16 %v891
  %v1129 = vunpack.c.h.b16 %v891
  %v1130 = vunpack.c.l.b16 %v892
  %v1131 = vunpack.c.h.b16 %v892
  %v1132 = vunpack.c.l.b16 %v893
  %v1133 = vunpack.c.h.b16 %v893
  %v1134 = vunpack.c.l.b16 %v894
  %v1135 = vunpack.c.h.b16 %v894
  %v1136 = vunpack.c.l.b16 %v895
  %v1137 = vunpack.c.h.b16 %v895
  %v1138 = vunpack.c.l.b16 %v896
  %v1139 = vunpack.c.h.b16 %v896
  %v1140 = vunpack.c.l.b16 %v897
  %v1141 = vunpack.c.h.b16 %v897
  %v1142 = vunpack.c.l.b16 %v898
  %v1143 = vunpack.c.h.b16 %v898
  %v1144 = vunpack.c.l.b16 %v899
  %v1145 = vunpack.c.h.b16 %v899
  %v1146 = vunpack.c.l.b16 %v900
  %v1147 = vunpack.c.h.b16 %v900
  %v1148 = vunpack.c.l.b16 %v901
  %v1149 = vunpack.c.h.b16 %v901
  %v1150 = vunpack.c.l.b16 %v902
  %v1151 = vunpack.c.h.b16 %v902
  %v1152 = vunpack.c.l.b16 %v903
  %v1153 = vunpack.c.h.b16 %v903
  %v1154 = vunpack.c.l.b16 %v904
  %v1155 = vunpack.c.h.b16 %v904
  %v1156 = vunpack.c.l.b16 %v905
  %v1157 = vunpack.c.h.b16 %v905
  %v1158 = vunpack.c.l.b16 %v906
  %v1159 = vunpack.c.h.b16 %v906
  %v1160 = vunpack.c.l.b16 %v907
  %v1161 = vunpack.c.h.b16 %v907
  %v1162 = vunpack.c.l.b16 %v908
  %v1163 = vunpack.c.h.b16 %v908
  %v1164 = vunpack.c.l.b16 %v909
  %v1165 = vunpack.c.h.b16 %v909
  %v1166 = vunpack.c.l.b16 %v910
  %v1167 = vunpack.c.h.b16 %v910
  %v1168 = vunpack.c.l.b16 %v911
  %v1169 = vunpack.c.h.b16 %v911
  %v1170 = vunpack.c.l.b16 %v912
  %v1171 = vunpack.c.h.b16 %v912
  %v1172 = vunpack.c.l.b16 %v913
  %v1173 = vunpack.c.h.b16 %v913
  %v1174 = vunpack.c.l.b16 %v914
  %v1175 = vunpack.c.h.b16 %v914
  %v1176 = vunpack.c.l.b16 %v915
  %v1177 = vunpack.c.h.b16 %v915
  %v1178 = vunpack.c.l.b16 %v916
  %v1179 = vunpack.c.h.b16 %v916
  %v1180 = vunpack.c.l.b16 %v917
  %v1181 = vunpack.c.h.b16 %v917
  %v1182 = vunpack.c.l.b16 %v918
  %v1183 = vunpack.c.h.b16 %v918
  %v1184 = vunpack.c.l.b16 %v919
  %v1185 = vunpack.c.h.b16 %v919
  %v1186 = vunpack.c.l.b16 %v920
  %v1187 = vunpack.c.h.b16 %v920
  %v1188 = vunpack.c.l.b16 %v921
  %v1189 = vunpack.c.h.b16 %v921
  %v1190 = vunpack.c.l.b16 %v922
  %v1191 = vunpack.c.h.b16 %v922
  %v1192 = vunpack.c.l.b16 %v923
  %v1193 = vunpack.c.h.b16 %v923
  %v1194 = vunpack.c.l.b16 %v924
  %v1195 = vunpack.c.h.b16 %v924
  %v1196 = vunpack.c.l.b16 %v925
  %v1197 = vunpack.c.h.b16 %v925
  %v1198 = vunpack.c.l.b16 %v926
  %v1199 = vunpack.c.h.b16 %v926
  %v1200 = vunpack.c.l.b16 %v927
  %v1201 = vunpack.c.h.b16 %v927
  %v1202 = vunpack.c.l.b16 %v928
  %v1203 = vunpack.c.h.b16 %v928
  %v1204 = vunpack.c.l.b16 %v929
  %v1205 = vunpack.c.h.b16 %v929
  %v1206 = vunpack.c.l.b16 %v930
  %v1207 = vunpack.c.h.b16 %v930
  %v1208 = vunpack.c.l.b16 %v931
  %v1209 = vunpack.c.h.b16 %v931
  %v1210 = vunpack.c.l.b16 %v932
  %v1211 = vunpack.c.h.b16 %v932
  %v1212 = vunpack.c.l.b16 %v933
  %v1213 = vunpack.c.h.b16 %v933
  %v1214 = vunpack.c.l.b16 %v934
  %v1215 = vunpack.c.h.b16 %v934
  %v1216 = vunpack.c.l.b16 %v935
  %v1217 = vunpack.c.h.b16 %v935
  %v1218 = vunpack.c.l.b16 %v936
  %v1219 = vunpack.c.h.b16 %v936
  %v1220 = vunpack.c.l.b16 %v937
  %v1221 = vunpack.c.h.b16 %v937
  %v1222 = vunpack.c.l.b16 %v938
  %v1223 = vunpack.c.h.b16 %v938
  %v1224 = vunpack.c.l.b16 %v939
  %v1225 = vunpack.c.h.b16 %v939
  %v1226 = vunpack.c.l.b16 %v940
  %v1227 = vunpack.c.h.b16 %v940
  %v1228 = vunpack.c.l.b16 %v941
  %v1229 = vunpack.c.h.b16 %v941
  %v1230 = vunpack.c.l.b16 %v942
  %v1231 = vunpack.c.h.b16 %v942
  %v1232 = vunpack.c.l.b16 %v943
  %v1233 = vunpack.c.h.b16 %v943
  %v1234 = vunpack.c.l.b16 %v944
  %v1235 = vunpack.c.h.b16 %v944
  %v1236 = vunpack.c.l.b16 %v945
  %v1237 = vunpack.c.h.b16 %v945
  %v1238 = vunpack.c.l.b16 %v946
  %v1239 = vunpack.c.h.b16 %v946
  %v1240 = vunpack.c.l.b16 %v947
  %v1241 = vunpack.c.h.b16 %v947
  %v1242 = vunpack.c.l.b16 %v948
  %v1243 = vunpack.c.h.b16 %v948
  %v1244 = vunpack.c.l.b16 %v949
  %v1245 = vunpack.c.h.b16 %v949
  %v1246 = vunpack.c.l.b16 %v950
  %v1247 = vunpack.c.h.b16 %v950
  %v1248 = vunpack.c.l.b16 %v951
  %v1249 = vunpack.c.h.b16 %v951
  %v1250 = vunpack.c.l.b16 %v952
  %v1251 = vunpack.c.h.b16 %v952
  %v1252 = vunpack.c.l.b16 %v953
  %v1253 = vunpack.c.h.b16 %v953
  %v1254 = vunpack.c.l.b16 %v954
  %v1255 = vunpack.c.h.b16 %v954
  %v1256 = vunpack.c.l.b16 %v955
  %v1257 = vunpack.c.h.b16 %v955
  %v1258 = vunpack.c.l.b16 %v956
  %v1259 = vunpack.c.h.b16 %v956
  %v1260 = vunpack.c.l.b16 %v957
  %v1261 = vunpack.c.h.b16 %v957
  %v1262 = vunpack.c.l.b16 %v958
  %v1263 = vunpack.c.h.b16 %v958
  %v1264 = vunpack.c.l.b16 %v959
  %v1265 = vunpack.c.h.b16 %v959
  %v1266 = vpack.c.b16 %v1072, %v1070
  %v1267 = vpack.c.b16 %v1073, %v1071
  %v1268 = vpack.c.b16 %v1076, %v1074
  %v1269 = vpack.c.b16 %v1077, %v1075
  %v1270 = vpack.c.b16 %v1080, %v1078
  %v1271 = vpack.c.b16 %v1081, %v1079
  %v1272 = vpack.c.b16 %v1084, %v1082
  %v1273 = vpack.c.b16 %v1085, %v1083
  %v1274 = vpack.c.b16 %v1088, %v1086
  %v1275 = vpack.c.b16 %v1089, %v1087
  %v1276 = vpack.c.b16 %v1092, %v1090
  %v1277 = vpack.c.b16 %v1093, %v1091
  %v1278 = vpack.c.b16 %v1096, %v1094
  %v1279 = vpack.c.b16 %v1097, %v1095
  %v1280 = vpack.c.b16 %v1100, %v1098
  %v1281 = vpack.c.b16 %v1101, %v1099
  %v1282 = vpack.c.b16 %v1104, %v1102
  %v1283 = vpack.c.b16 %v1105, %v1103
  %v1284 = vpack.c.b16 %v1108, %v1106
  %v1285 = vpack.c.b16 %v1109, %v1107
  %v1286 = vpack.c.b16 %v1112, %v1110
  %v1287 = vpack.c.b16 %v1113, %v1111
  %v1288 = vpack.c.b16 %v1116, %v1114
  %v1289 = vpack.c.b16 %v1117, %v1115
  %v1290 = vpack.c.b16 %v1120, %v1118
  %v1291 = vpack.c.b16 %v1121, %v1119
  %v1292 = vpack.c.b16 %v1124, %v1122
  %v1293 = vpack.c.b16 %v1125, %v1123
  %v1294 = vpack.c.b16 %v1128, %v1126
  %v1295 = vpack.c.b16 %v1129, %v1127
  %v1296 = vpack.c.b16 %v1132, %v1130
  %v1297 = vpack.c.b16 %v1133, %v1131
  %v1298 = vpack.c.b16 %v1136, %v1134
  %v1299 = vpack.c.b16 %v1137, %v1135
  %v1300 = vpack.c.b16 %v1140, %v1138
  %v1301 = vpack.c.b16 %v1141, %v1139
  %v1302 = vpack.c.b16 %v1144, %v1142
  %v1303 = vpack.c.b16 %v1145, %v1143
  %v1304 = vpack.c.b16 %v1148, %v1146
  %v1305 = vpack.c.b16 %v1149, %v1147
  %v1306 = vpack.c.b16 %v1152, %v1150
  %v1307 = vpack.c.b16 %v1153, %v1151
  %v1308 = vpack.c.b16 %v1156, %v1154
  %v1309 = vpack.c.b16 %v1157, %v1155
  %v1310 = vpack.c.b16 %v1160, %v1158
  %v1311 = vpack.c.b16 %v1161, %v1159
  %v1312 = vpack.c.b16 %v1164, %v1162
  %v1313 = vpack.c.b16 %v1165, %v1163
  %v1314 = vpack.c.b16 %v1168, %v1166
  %v1315 = vpack.c.b16 %v1169, %v1167
  %v1316 = vpack.c.b16 %v1172, %v1170
  %v1317 = vpack.c.b16 %v1173, %v1171
  %v1318 = vpack.c.b16 %v1176, %v1174
  %v1319 = vpack.c.b16 %v1177, %v1175
  %v1320 = vpack.c.b16 %v1180, %v1178
  %v1321 = vpack.c.b16 %v1181, %v1179
  %v1322 = vpack.c.b16 %v1184, %v1182
  %v1323 = vpack.c.b16 %v1185, %v1183
  %v1324 = vpack.c.b16 %v1188, %v1186
  %v1325 = vpack.c.b16 %v1189, %v1187
  %v1326 = vpack.c.b16 %v1192, %v1190
  %v1327 = vpack.c.b16 %v1193, %v1191
  %v1328 = vpack.c.b16 %v1196, %v1194
  %v1329 = vpack.c.b16 %v1197, %v1195
  %v1330 = vpack.c.b16 %v1200, %v1198
  %v1331 = vpack.c.b16 %v1201, %v1199
  %v1332 = vpack.c.b16 %v1204, %v1202
  %v1333 = vpack.c.b16 %v1205, %v1203
  %v1334 = vpack.c.b16 %v1208, %v1206
  %v1335 = vpack.c.b16 %v1209, %v1207
  %v1336 = vpack.c.b16 %v1212, %v1210
  %v1337 = vpack.c.b16 %v1213, %v1211
  %v1338 = vpack.c.b16 %v1216, %v1214
  %v1339 = vpack.c.b16 %v1217, %v1215
  %v1340 = vpack.c.b16 %v1220, %v1218
  %v1341 = vpack.c.b16 %v1221, %v1219
  %v1342 = vpack.c.b16 %v1224, %v1222
  %v1343 = vpack.c.b16 %v1225, %v1223
  %v1344 = vpack.c.b16 %v1228, %v1226
  %v1345 = vpack.c.b16 %v1229, %v1227
  %v1346 = vpack.c.b16 %v1232, %v1230
  %v1347 = vpack.c.b16 %v1233, %v1231
  %v1348 = vpack.c.b16 %v1236, %v1234
  %v1349 = vpack.c.b16 %v1237, %v1235
  %v1350 = vpack.c.b16 %v1240, %v1238
  %v1351 = vpack.c.b16 %v1241, %v1239
  %v1352 = vpack.c.b16 %v1244, %v1242
  %v1353 = vpack.c.b16 %v1245, %v1243
  %v1354 = vpack.c.b16 %v1248, %v1246
  %v1355 = vpack.c.b16 %v1249, %v1247
  %v1356 = vpack.c.b16 %v1252, %v1250
  %v1357 = vpack.c.b16 %v1253, %v1251
  %v1358 = vpack.c.b16 %v1256, %v1254
  %v1359 = vpack.c.b16 %v1257, %v1255
  %v1360 = vpack.c.b16 %v1260, %v1258
  %v1361 = vpack.c.b16 %v1261, %v1259
  %v1362 = vpack.c.b16 %v1264, %v1262
  %v1363 = vpack.c.b16 %v1265, %v1263
  %1462 = vmatprep.subr.bf16.mxu0 %v1267
  %1463 = vmatpush1.bf16.msra.mxu0 %v1266
  %1464 = vmatprep.subr.bf16.mxu0 %v1269
  %1465 = vmatpush1.bf16.msra.mxu0 %v1268
  %1466 = vmatprep.subr.bf16.mxu0 %v1271
  %1467 = vmatpush1.bf16.msra.mxu0 %v1270
  %1468 = vmatprep.subr.bf16.mxu0 %v1273
  %1469 = vmatpush1.bf16.msra.mxu0 %v1272
  %1470 = vmatprep.subr.bf16.mxu0 %v1275
  %1471 = vmatpush1.bf16.msra.mxu0 %v1274
  %1472 = vmatprep.subr.bf16.mxu0 %v1277
  %1473 = vmatpush1.bf16.msra.mxu0 %v1276
  %1474 = vmatprep.subr.bf16.mxu0 %v1279
  %1475 = vmatpush1.bf16.msra.mxu0 %v1278
  %1476 = vmatprep.subr.bf16.mxu0 %v1281
  %1477 = vmatpush1.bf16.msra.mxu0 %v1280
  %1478 = vmatprep.subr.bf16.mxu0 %v1283
  %1479 = vmatpush1.bf16.msra.mxu0 %v1282
  %1480 = vmatprep.subr.bf16.mxu0 %v1285
  %1481 = vmatpush1.bf16.msra.mxu0 %v1284
  %1482 = vmatprep.subr.bf16.mxu0 %v1287
  %1483 = vmatpush1.bf16.msra.mxu0 %v1286
  %1484 = vmatprep.subr.bf16.mxu0 %v1289
  %1485 = vmatpush1.bf16.msra.mxu0 %v1288
  %1486 = vmatprep.subr.bf16.mxu0 %v1291
  %1487 = vmatpush1.bf16.msra.mxu0 %v1290
  %1488 = vmatprep.subr.bf16.mxu0 %v1293
  %1489 = vmatpush1.bf16.msra.mxu0 %v1292
  %1490 = vmatprep.subr.bf16.mxu0 %v1295
  %1491 = vmatpush1.bf16.msra.mxu0 %v1294
  %1492 = vmatprep.subr.bf16.mxu0 %v1297
  %1493 = vmatpush1.bf16.msra.mxu0 %v1296
  %1494 = vmatprep.mubr.bf16.mxu0 %v42
  %1495 = vmatmul.mubr.bf16.gmra.mrb[0].mxu0 %v41
  %v1496 = vpop.f32.mrb[0].mxu0
  %v1497 = vadd.f32 %v965, %v1496
  %v1498 = vpop.f32.mrb[0].mxu0
  %v1499 = vadd.f32 %v969, %v1498
  %v1500 = vpop.f32.mrb[0].mxu0
  %v1501 = vadd.f32 %v965, %v1500
  %v1502 = vpop.f32.mrb[0].mxu0
  %v1503 = vadd.f32 %v969, %v1502
  %1504 = vdwg.mxu0
  %1505 = vmatprep.subr.bf16.mxu0 %v1299
  %1506 = vmatpush1.bf16.msra.mxu0 %v1298
  %1507 = vmatprep.subr.bf16.mxu0 %v1301
  %1508 = vmatpush1.bf16.msra.mxu0 %v1300
  %1509 = vmatprep.subr.bf16.mxu0 %v1303
  %1510 = vmatpush1.bf16.msra.mxu0 %v1302
  %1511 = vmatprep.subr.bf16.mxu0 %v1305
  %1512 = vmatpush1.bf16.msra.mxu0 %v1304
  %1513 = vmatprep.subr.bf16.mxu0 %v1307
  %1514 = vmatpush1.bf16.msra.mxu0 %v1306
  %1515 = vmatprep.subr.bf16.mxu0 %v1309
  %1516 = vmatpush1.bf16.msra.mxu0 %v1308
  %1517 = vmatprep.subr.bf16.mxu0 %v1311
  %1518 = vmatpush1.bf16.msra.mxu0 %v1310
  %1519 = vmatprep.subr.bf16.mxu0 %v1313
  %1520 = vmatpush1.bf16.msra.mxu0 %v1312
  %1521 = vmatprep.subr.bf16.mxu0 %v1315
  %1522 = vmatpush1.bf16.msra.mxu0 %v1314
  %1523 = vmatprep.subr.bf16.mxu0 %v1317
  %1524 = vmatpush1.bf16.msra.mxu0 %v1316
  %1525 = vmatprep.subr.bf16.mxu0 %v1319
  %1526 = vmatpush1.bf16.msra.mxu0 %v1318
  %1527 = vmatprep.subr.bf16.mxu0 %v1321
  %1528 = vmatpush1.bf16.msra.mxu0 %v1320
  %1529 = vmatprep.subr.bf16.mxu0 %v1323
  %1530 = vmatpush1.bf16.msra.mxu0 %v1322
  %1531 = vmatprep.subr.bf16.mxu0 %v1325
  %1532 = vmatpush1.bf16.msra.mxu0 %v1324
  %1533 = vmatprep.subr.bf16.mxu0 %v1327
  %1534 = vmatpush1.bf16.msra.mxu0 %v1326
  %1535 = vmatprep.subr.bf16.mxu0 %v1329
  %1536 = vmatpush1.bf16.msra.mxu0 %v1328
  %1537 = vmatprep.mubr.bf16.mxu0 %v44
  %1538 = vmatmul.mubr.bf16.gmra.mrb[0].mxu0 %v43
  %v1539 = vpop.f32.mrb[0].mxu0
  %v1540 = vadd.f32 %v1497, %v1539
  %v1541 = vpop.f32.mrb[0].mxu0
  %v1542 = vadd.f32 %v1499, %v1541
  %v1543 = vpop.f32.mrb[0].mxu0
  %v1544 = vadd.f32 %v1501, %v1543
  %v1545 = vpop.f32.mrb[0].mxu0
  %v1546 = vadd.f32 %v1503, %v1545
  %1547 = vdwg.mxu0
  %1548 = vmatprep.subr.bf16.mxu0 %v1331
  %1549 = vmatpush1.bf16.msra.mxu0 %v1330
  %1550 = vmatprep.subr.bf16.mxu0 %v1333
  %1551 = vmatpush1.bf16.msra.mxu0 %v1332
  %1552 = vmatprep.subr.bf16.mxu0 %v1335
  %1553 = vmatpush1.bf16.msra.mxu0 %v1334
  %1554 = vmatprep.subr.bf16.mxu0 %v1337
  %1555 = vmatpush1.bf16.msra.mxu0 %v1336
  %1556 = vmatprep.subr.bf16.mxu0 %v1339
  %1557 = vmatpush1.bf16.msra.mxu0 %v1338
  %1558 = vmatprep.subr.bf16.mxu0 %v1341
  %1559 = vmatpush1.bf16.msra.mxu0 %v1340
  %1560 = vmatprep.subr.bf16.mxu0 %v1343
  %1561 = vmatpush1.bf16.msra.mxu0 %v1342
  %1562 = vmatprep.subr.bf16.mxu0 %v1345
  %1563 = vmatpush1.bf16.msra.mxu0 %v1344
  %1564 = vmatprep.subr.bf16.mxu0 %v1347
  %1565 = vmatpush1.bf16.msra.mxu0 %v1346
  %1566 = vmatprep.subr.bf16.mxu0 %v1349
  %1567 = vmatpush1.bf16.msra.mxu0 %v1348
  %1568 = vmatprep.subr.bf16.mxu0 %v1351
  %1569 = vmatpush1.bf16.msra.mxu0 %v1350
  %1570 = vmatprep.subr.bf16.mxu0 %v1353
  %1571 = vmatpush1.bf16.msra.mxu0 %v1352
  %1572 = vmatprep.subr.bf16.mxu0 %v1355
  %1573 = vmatpush1.bf16.msra.mxu0 %v1354
  %1574 = vmatprep.subr.bf16.mxu0 %v1357
  %1575 = vmatpush1.bf16.msra.mxu0 %v1356
  %1576 = vmatprep.subr.bf16.mxu0 %v1359
  %1577 = vmatpush1.bf16.msra.mxu0 %v1358
  %1578 = vmatprep.subr.bf16.mxu0 %v1361
  %1579 = vmatpush1.bf16.msra.mxu0 %v1360
  %1580 = vmatprep.mubr.bf16.mxu0 %v46
  %1581 = vmatmul.mubr.bf16.gmra.mrb[0].mxu0 %v45
  %v1582 = vpop.f32.mrb[0].mxu0
  %v1583 = vadd.f32 %v1540, %v1582
  %v1584 = vpop.f32.mrb[0].mxu0
  %v1585 = vadd.f32 %v1542, %v1584
  %v1586 = vpop.f32.mrb[0].mxu0
  %v1587 = vadd.f32 %v1544, %v1586
  %v1588 = vpop.f32.mrb[0].mxu0
  %v1589 = vadd.f32 %v1546, %v1588
  %1590 = vdwg.mxu0
  %1591 = vmatprep.subr.bf16.mxu0 %v1363
  %1592 = vmatpush1.bf16.msra.mxu0 %v1362
  %1593 = vmatprep.subr.bf16.mxu0 0
  %1594 = vmatpush1.bf16.msra.mxu0 0
  %1595 = vmatprep.subr.bf16.mxu0 0
  %1596 = vmatpush1.bf16.msra.mxu0 0
  %1597 = vmatprep.subr.bf16.mxu0 0
  %1598 = vmatpush1.bf16.msra.mxu0 0
  %1599 = vmatprep.subr.bf16.mxu0 0
  %1600 = vmatpush1.bf16.msra.mxu0 0
  %1601 = vmatprep.subr.bf16.mxu0 0
  %1602 = vmatpush1.bf16.msra.mxu0 0
  %1603 = vmatprep.subr.bf16.mxu0 0
  %1604 = vmatpush1.bf16.msra.mxu0 0
  %1605 = vmatprep.subr.bf16.mxu0 0
  %1606 = vmatpush1.bf16.msra.mxu0 0
  %1607 = vmatprep.subr.bf16.mxu0 0
  %1608 = vmatpush1.bf16.msra.mxu0 0
  %1609 = vmatprep.subr.bf16.mxu0 0
  %1610 = vmatpush1.bf16.msra.mxu0 0
  %1611 = vmatprep.subr.bf16.mxu0 0
  %1612 = vmatpush1.bf16.msra.mxu0 0
  %1613 = vmatprep.subr.bf16.mxu0 0
  %1614 = vmatpush1.bf16.msra.mxu0 0
  %1615 = vmatprep.subr.bf16.mxu0 0
  %1616 = vmatpush1.bf16.msra.mxu0 0
  %1617 = vmatprep.subr.bf16.mxu0 0
  %1618 = vmatpush1.bf16.msra.mxu0 0
  %1619 = vmatprep.subr.bf16.mxu0 0
  %1620 = vmatpush1.bf16.msra.mxu0 0
  %1621 = vmatprep.subr.bf16.mxu0 0
  %1622 = vmatpush1.bf16.msra.mxu0 0
  %1623 = vmatprep.mubr.bf16.mxu0 0
  %1624 = vmatmul.mubr.bf16.gmra.mrb[0].mxu0 %v650
  %v1625 = vpop.f32.mrb[0].mxu0
  %v1626 = vadd.f32 %v1583, %v1625
  %v1627 = vpop.f32.mrb[0].mxu0
  %v1628 = vadd.f32 %v1585, %v1627
  %v1629 = vpop.f32.mrb[0].mxu0
  %v1630 = vadd.f32 %v1587, %v1629
  %v1631 = vpop.f32.mrb[0].mxu0
  %v1632 = vadd.f32 %v1589, %v1631
  %1633 = vdwg.mxu0
  %v1634 = vmax.f32 %v1626, 0.0
  %v1635 = vmax.f32 %v1628, 0.0
  %v1636 = vmax.f32 %v1630, 0.0
  %v1637 = vmax.f32 %v1632, 0.0
  %v1638 = vpack.c.bf16 %v1636, %v1634
  %v1639 = vpack.c.bf16 %v1637, %v1635
  %v1640 = vld [vmem:[%s3 + $0x80] sm:$0xf]
  %v1641 = vld [vmem:[%s3 + $0x84] sm:$0xf]
  %v1642 = vld [vmem:[%s3 + $0x88] sm:$0xf]
  %v1643 = vld [vmem:[%s3 + $0x8c] sm:$0xf]
  %v1644 = vld [vmem:[%s3 + $0x90] sm:$0xf]
  %v1645 = vld [vmem:[%s3 + $0x94] sm:$0xf]
  %v1646 = vld [vmem:[%s3 + $0x98] sm:$0xf]
  %v1647 = vld [vmem:[%s3 + $0x9c] sm:$0xf]
  %v1648 = vld [vmem:[%s3 + $0xa0] sm:$0xf]
  %v1649 = vld [vmem:[%s3 + $0xa4] sm:$0xf]
  %v1650 = vld [vmem:[%s3 + $0xa8] sm:$0xf]
  %v1651 = vld [vmem:[%s3 + $0xac] sm:$0xf]
  %v1652 = vld [vmem:[%s3 + $0xb0] sm:$0xf]
  %v1653 = vld [vmem:[%s3 + $0xb4] sm:$0xf]
  %v1654 = vld [vmem:[%s3 + $0xb8] sm:$0xf]
  %v1655 = vld [vmem:[%s3 + $0xbc] sm:$0xf]
  %v1656 = vld [vmem:[%s3 + $0xc0] sm:$0xf]
  %v1657 = vld [vmem:[%s3 + $0xc4] sm:$0xf]
  %v1658 = vld [vmem:[%s3 + $0xc8] sm:$0xf]
  %v1659 = vld [vmem:[%s3 + $0xcc] sm:$0xf]
  %v1660 = vld [vmem:[%s3 + $0xd0] sm:$0xf]
  %v1661 = vld [vmem:[%s3 + $0xd4] sm:$0xf]
  %v1662 = vld [vmem:[%s3 + $0xd8] sm:$0xf]
  %v1663 = vld [vmem:[%s3 + $0xdc] sm:$0xf]
  %v1664 = vld [vmem:[%s3 + $0xe0] sm:$0xf]
  %v1665 = vld [vmem:[%s3 + $0xe4] sm:$0xf]
  %v1666 = vld [vmem:[%s3 + $0xe8] sm:$0xf]
  %v1667 = vld [vmem:[%s3 + $0xec] sm:$0xf]
  %v1668 = vld [vmem:[%s3 + $0xf0] sm:$0xf]
  %v1669 = vld [vmem:[%s3 + $0xf4] sm:$0xf]
  %v1670 = vld [vmem:[%s3 + $0xf8] sm:$0xf]
  %v1671 = vld [vmem:[%s3 + $0xfc] sm:$0xf]
  %v1704 = vunpack.c.l.b16 %v1640
  %v1705 = vunpack.c.l.b16 %v1641
  %v1706 = vunpack.c.l.b16 %v1642
  %v1707 = vunpack.c.l.b16 %v1643
  %v1708 = vunpack.c.l.b16 %v1644
  %v1709 = vunpack.c.l.b16 %v1645
  %v1710 = vunpack.c.l.b16 %v1646
  %v1711 = vunpack.c.l.b16 %v1647
  %v1712 = vunpack.c.l.b16 %v1648
  %v1713 = vunpack.c.l.b16 %v1649
  %v1714 = vunpack.c.l.b16 %v1650
  %v1715 = vunpack.c.l.b16 %v1651
  %v1716 = vunpack.c.l.b16 %v1652
  %v1717 = vunpack.c.l.b16 %v1653
  %v1718 = vunpack.c.l.b16 %v1654
  %v1719 = vunpack.c.l.b16 %v1655
  %v1720 = vunpack.c.l.b16 %v1656
  %v1721 = vunpack.c.l.b16 %v1657
  %v1722 = vunpack.c.l.b16 %v1658
  %v1723 = vunpack.c.l.b16 %v1659
  %v1724 = vunpack.c.l.b16 %v1660
  %v1725 = vunpack.c.l.b16 %v1661
  %v1726 = vunpack.c.l.b16 %v1662
  %v1727 = vunpack.c.l.b16 %v1663
  %v1728 = vunpack.c.l.b16 %v1664
  %v1729 = vunpack.c.l.b16 %v1665
  %v1730 = vunpack.c.l.b16 %v1666
  %v1731 = vunpack.c.l.b16 %v1667
  %v1732 = vunpack.c.l.b16 %v1668
  %v1733 = vunpack.c.l.b16 %v1669
  %v1734 = vunpack.c.l.b16 %v1670
  %v1735 = vunpack.c.l.b16 %v1671
  %v1736 = vpack.c.b16 %v1705, %v1704
  %v1737 = vpack.c.b16 %v1707, %v1706
  %v1738 = vpack.c.b16 %v1709, %v1708
  %v1739 = vpack.c.b16 %v1711, %v1710
  %v1740 = vpack.c.b16 %v1713, %v1712
  %v1741 = vpack.c.b16 %v1715, %v1714
  %v1742 = vpack.c.b16 %v1717, %v1716
  %v1743 = vpack.c.b16 %v1719, %v1718
  %v1744 = vpack.c.b16 %v1721, %v1720
  %v1745 = vpack.c.b16 %v1723, %v1722
  %v1746 = vpack.c.b16 %v1725, %v1724
  %v1747 = vpack.c.b16 %v1727, %v1726
  %v1748 = vpack.c.b16 %v1729, %v1728
  %v1749 = vpack.c.b16 %v1731, %v1730
  %v1750 = vpack.c.b16 %v1733, %v1732
  %v1751 = vpack.c.b16 %v1735, %v1734
  %1768 = vmatprep.subr.bf16.mxu0 0
  %1769 = vmatpush1.bf16.msra.mxu0 %v1736
  %1770 = vmatprep.subr.bf16.mxu0 0
  %1771 = vmatpush1.bf16.msra.mxu0 %v1737
  %1772 = vmatprep.subr.bf16.mxu0 0
  %1773 = vmatpush1.bf16.msra.mxu0 %v1738
  %1774 = vmatprep.subr.bf16.mxu0 0
  %1775 = vmatpush1.bf16.msra.mxu0 %v1739
  %1776 = vmatprep.subr.bf16.mxu0 0
  %1777 = vmatpush1.bf16.msra.mxu0 %v1740
  %1778 = vmatprep.subr.bf16.mxu0 0
  %1779 = vmatpush1.bf16.msra.mxu0 %v1741
  %1780 = vmatprep.subr.bf16.mxu0 0
  %1781 = vmatpush1.bf16.msra.mxu0 %v1742
  %1782 = vmatprep.subr.bf16.mxu0 0
  %1783 = vmatpush1.bf16.msra.mxu0 %v1743
  %1784 = vmatprep.subr.bf16.mxu0 0
  %1785 = vmatpush1.bf16.msra.mxu0 %v1744
  %1786 = vmatprep.subr.bf16.mxu0 0
  %1787 = vmatpush1.bf16.msra.mxu0 %v1745
  %1788 = vmatprep.subr.bf16.mxu0 0
  %1789 = vmatpush1.bf16.msra.mxu0 %v1746
  %1790 = vmatprep.subr.bf16.mxu0 0
  %1791 = vmatpush1.bf16.msra.mxu0 %v1747
  %1792 = vmatprep.subr.bf16.mxu0 0
  %1793 = vmatpush1.bf16.msra.mxu0 %v1748
  %1794 = vmatprep.subr.bf16.mxu0 0
  %1795 = vmatpush1.bf16.msra.mxu0 %v1749
  %1796 = vmatprep.subr.bf16.mxu0 0
  %1797 = vmatpush1.bf16.msra.mxu0 %v1750
  %1798 = vmatprep.subr.bf16.mxu0 0
  %1799 = vmatpush1.bf16.msra.mxu0 %v1751
  %1800 = vmatprep.mubr.bf16.mxu0 %v1639
  %1801 = vmatmul.mubr.bf16.gmra.mrb[0].mxu0 %v1638
  %v1802 = vpop.f32.mrb[0].mxu0
  %v1803 = vadd.f32 0.0, %v1802
  %v1804 = vpop.f32.mrb[0].mxu0
  %v1805 = vpop.f32.mrb[0].mxu0
  %v1806 = vadd.f32 0.0, %v1805
  %v1807 = vpop.f32.mrb[0].mxu0
  %1808 = vdwg.mxu0
  %v1841 = vunpack.c.l.b16 %v830
  %v1842 = vunpack.c.l.b16 %v831
  %v1843 = vunpack.c.l.b16 %v832
  %v1844 = vunpack.c.l.b16 %v833
  %v1845 = vunpack.c.l.b16 %v834
  %v1846 = vunpack.c.l.b16 %v835
  %v1847 = vunpack.c.l.b16 %v836
  %v1848 = vunpack.c.l.b16 %v837
  %v1849 = vunpack.c.l.b16 %v838
  %v1850 = vunpack.c.l.b16 %v839
  %v1851 = vunpack.c.l.b16 %v840
  %v1852 = vunpack.c.l.b16 %v841
  %v1853 = vunpack.c.l.b16 %v842
  %v1854 = vunpack.c.l.b16 %v843
  %v1855 = vunpack.c.l.b16 %v844
  %v1856 = vunpack.c.l.b16 %v845
  %v1857 = vunpack.c.l.b16 %v846
  %v1858 = vunpack.c.l.b16 %v847
  %v1859 = vunpack.c.l.b16 %v848
  %v1860 = vunpack.c.l.b16 %v849
  %v1861 = vunpack.c.l.b16 %v850
  %v1862 = vunpack.c.l.b16 %v851
  %v1863 = vunpack.c.l.b16 %v852
  %v1864 = vunpack.c.l.b16 %v853
  %v1865 = vunpack.c.l.b16 %v854
  %v1866 = vunpack.c.l.b16 %v855
  %v1867 = vunpack.c.l.b16 %v856
  %v1868 = vunpack.c.l.b16 %v857
  %v1869 = vunpack.c.l.b16 %v858
  %v1870 = vunpack.c.l.b16 %v859
  %v1871 = vunpack.c.l.b16 %v860
  %v1872 = vunpack.c.l.b16 %v861
  %v1873 = vpack.c.b16 %v1842, %v1841
  %v1874 = vpack.c.b16 %v1844, %v1843
  %v1875 = vpack.c.b16 %v1846, %v1845
  %v1876 = vpack.c.b16 %v1848, %v1847
  %v1877 = vpack.c.b16 %v1850, %v1849
  %v1878 = vpack.c.b16 %v1852, %v1851
  %v1879 = vpack.c.b16 %v1854, %v1853
  %v1880 = vpack.c.b16 %v1856, %v1855
  %v1881 = vpack.c.b16 %v1858, %v1857
  %v1882 = vpack.c.b16 %v1860, %v1859
  %v1883 = vpack.c.b16 %v1862, %v1861
  %v1884 = vpack.c.b16 %v1864, %v1863
  %v1885 = vpack.c.b16 %v1866, %v1865
  %v1886 = vpack.c.b16 %v1868, %v1867
  %v1887 = vpack.c.b16 %v1870, %v1869
  %v1888 = vpack.c.b16 %v1872, %v1871
  %1905 = vmatprep.subr.bf16.mxu0 0
  %1906 = vmatpush1.bf16.msra.mxu0 %v1873
  %1907 = vmatprep.subr.bf16.mxu0 0
  %1908 = vmatpush1.bf16.msra.mxu0 %v1874
  %1909 = vmatprep.subr.bf16.mxu0 0
  %1910 = vmatpush1.bf16.msra.mxu0 %v1875
  %1911 = vmatprep.subr.bf16.mxu0 0
  %1912 = vmatpush1.bf16.msra.mxu0 %v1876
  %1913 = vmatprep.subr.bf16.mxu0 0
  %1914 = vmatpush1.bf16.msra.mxu0 %v1877
  %1915 = vmatprep.subr.bf16.mxu0 0
  %1916 = vmatpush1.bf16.msra.mxu0 %v1878
  %1917 = vmatprep.subr.bf16.mxu0 0
  %1918 = vmatpush1.bf16.msra.mxu0 %v1879
  %1919 = vmatprep.subr.bf16.mxu0 0
  %1920 = vmatpush1.bf16.msra.mxu0 %v1880
  %1921 = vmatprep.subr.bf16.mxu0 0
  %1922 = vmatpush1.bf16.msra.mxu0 %v1881
  %1923 = vmatprep.subr.bf16.mxu0 0
  %1924 = vmatpush1.bf16.msra.mxu0 %v1882
  %1925 = vmatprep.subr.bf16.mxu0 0
  %1926 = vmatpush1.bf16.msra.mxu0 %v1883
  %1927 = vmatprep.subr.bf16.mxu0 0
  %1928 = vmatpush1.bf16.msra.mxu0 %v1884
  %1929 = vmatprep.subr.bf16.mxu0 0
  %1930 = vmatpush1.bf16.msra.mxu0 %v1885
  %1931 = vmatprep.subr.bf16.mxu0 0
  %1932 = vmatpush1.bf16.msra.mxu0 %v1886
  %1933 = vmatprep.subr.bf16.mxu0 0
  %1934 = vmatpush1.bf16.msra.mxu0 %v1887
  %1935 = vmatprep.subr.bf16.mxu0 0
  %1936 = vmatpush1.bf16.msra.mxu0 %v1888
  %1937 = vmatprep.mubr.bf16.mxu0 %v829
  %1938 = vmatmul.mubr.bf16.gmra.mrb[0].mxu0 %v828
  %v1939 = vpop.f32.mrb[0].mxu0
  %v1940 = vadd.f32 %v1803, %v1939
  %v1941 = vpop.f32.mrb[0].mxu0
  %v1942 = vpop.f32.mrb[0].mxu0
  %v1943 = vadd.f32 %v1806, %v1942
  %v1944 = vpop.f32.mrb[0].mxu0
  %1945 = vdwg.mxu0
  %v1946 = vld [vmem:[%s4] sm:$0x1]
  %v1948 = vlaneseq
  %v1949 = vshrl.u32 %v1948, 7
  %v1950 = vsub.s32 0, %v1949
  %v1951 = vrot.slane %v1946, %v1950
  %v1953 = vadd.f32 %v1940, %v1951
  %v1954 = vadd.f32 %v1943, %v1951
  %v1955 = vmax.f32 %v1953, 0.0
  %v1956 = vmax.f32 %v1954, 0.0
  %v1957 = vpack.c.bf16 %v1956, %v1955
  %v1958 = vld [vmem:[%s5] sm:$0xf]
  %v1959 = vld [vmem:[%s5 + $0x4] sm:$0xf]
  %v1960 = vld [vmem:[%s5 + $0x8] sm:$0xf]
  %v1961 = vld [vmem:[%s5 + $0xc] sm:$0xf]
  %v1962 = vld [vmem:[%s5 + $0x10] sm:$0xf]
  %v1963 = vld [vmem:[%s5 + $0x14] sm:$0xf]
  %v1964 = vld [vmem:[%s5 + $0x18] sm:$0xf]
  %v1965 = vld [vmem:[%s5 + $0x1c] sm:$0xf]
  %v1966 = vld [vmem:[%s5 + $0x20] sm:$0xf]
  %v1967 = vld [vmem:[%s5 + $0x24] sm:$0xf]
  %v1968 = vld [vmem:[%s5 + $0x28] sm:$0xf]
  %v1969 = vld [vmem:[%s5 + $0x2c] sm:$0xf]
  %v1970 = vld [vmem:[%s5 + $0x30] sm:$0xf]
  %v1971 = vld [vmem:[%s5 + $0x34] sm:$0xf]
  %v1972 = vld [vmem:[%s5 + $0x38] sm:$0xf]
  %v1973 = vld [vmem:[%s5 + $0x3c] sm:$0xf]
  %v1974 = vld [vmem:[%s6] sm:$0x1]
  %v1976 = vlaneseq
  %v1977 = vshrl.u32 %v1976, 7
  %v1978 = vsub.s32 0, %v1977
  %v1979 = vrot.slane %v1974, %v1978
  %v1997 = vunpack.c.l.b16 %v1958
  %v1998 = vunpack.c.l.b16 %v1959
  %v1999 = vunpack.c.l.b16 %v1960
  %v2000 = vunpack.c.l.b16 %v1961
  %v2001 = vunpack.c.l.b16 %v1962
  %v2002 = vunpack.c.l.b16 %v1963
  %v2003 = vunpack.c.l.b16 %v1964
  %v2004 = vunpack.c.l.b16 %v1965
  %v2005 = vunpack.c.l.b16 %v1966
  %v2006 = vunpack.c.l.b16 %v1967
  %v2007 = vunpack.c.l.b16 %v1968
  %v2008 = vunpack.c.l.b16 %v1969
  %v2009 = vunpack.c.l.b16 %v1970
  %v2010 = vunpack.c.l.b16 %v1971
  %v2011 = vunpack.c.l.b16 %v1972
  %v2012 = vunpack.c.l.b16 %v1973
  %v2013 = vpack.c.b16 %v1998, %v1997
  %v2014 = vpack.c.b16 %v2000, %v1999
  %v2015 = vpack.c.b16 %v2002, %v2001
  %v2016 = vpack.c.b16 %v2004, %v2003
  %v2017 = vpack.c.b16 %v2006, %v2005
  %v2018 = vpack.c.b16 %v2008, %v2007
  %v2019 = vpack.c.b16 %v2010, %v2009
  %v2020 = vpack.c.b16 %v2012, %v2011
  %2029 = vmatprep.subr.bf16.mxu0 0
  %2030 = vmatpush1.bf16.msra.mxu0 %v2013
  %2031 = vmatprep.subr.bf16.mxu0 0
  %2032 = vmatpush1.bf16.msra.mxu0 %v2014
  %2033 = vmatprep.subr.bf16.mxu0 0
  %2034 = vmatpush1.bf16.msra.mxu0 %v2015
  %2035 = vmatprep.subr.bf16.mxu0 0
  %2036 = vmatpush1.bf16.msra.mxu0 %v2016
  %2037 = vmatprep.subr.bf16.mxu0 0
  %2038 = vmatpush1.bf16.msra.mxu0 %v2017
  %2039 = vmatprep.subr.bf16.mxu0 0
  %2040 = vmatpush1.bf16.msra.mxu0 %v2018
  %2041 = vmatprep.subr.bf16.mxu0 0
  %2042 = vmatpush1.bf16.msra.mxu0 %v2019
  %2043 = vmatprep.subr.bf16.mxu0 0
  %2044 = vmatpush1.bf16.msra.mxu0 %v2020
  %2045 = vmatprep.subr.bf16.mxu0 0
  %2046 = vmatpush1.bf16.msra.mxu0 0
  %2047 = vmatprep.subr.bf16.mxu0 0
  %2048 = vmatpush1.bf16.msra.mxu0 0
  %2049 = vmatprep.subr.bf16.mxu0 0
  %2050 = vmatpush1.bf16.msra.mxu0 0
  %2051 = vmatprep.subr.bf16.mxu0 0
  %2052 = vmatpush1.bf16.msra.mxu0 0
  %2053 = vmatprep.subr.bf16.mxu0 0
  %2054 = vmatpush1.bf16.msra.mxu0 0
  %2055 = vmatprep.subr.bf16.mxu0 0
  %2056 = vmatpush1.bf16.msra.mxu0 0
  %2057 = vmatprep.subr.bf16.mxu0 0
  %2058 = vmatpush1.bf16.msra.mxu0 0
  %2059 = vmatprep.subr.bf16.mxu0 0
  %2060 = vmatpush1.bf16.msra.mxu0 0
  %2061 = vmatprep.mubr.bf16.mxu0 0
  %2062 = vmatmul.mubr.bf16.gmra.mrb[0].mxu0 %v1957
  %v2063 = vpop.f32.mrb[0].mxu0
  %v2064 = vadd.f32 %v1979, %v2063
  %v2065 = vpop.f32.mrb[0].mxu0
  %v2066 = vpop.f32.mrb[0].mxu0
  %v2067 = vadd.f32 %v1979, %v2066
  %v2068 = vpop.f32.mrb[0].mxu0
  %2069 = vdwg.mxu0
  %v2070 = vmax.f32 %v2064, 0.0
  %v2071 = vmax.f32 %v2067, 0.0
  %v2072 = vpack.c.bf16 %v2071, %v2070
  %v2074 = vunpack.c.l.b16 %v2072
  %v2075 = vunpack.c.h.b16 %v2072
  %v2076 = vpack.c.b16 %v2074, %v2074
  %v2077 = vpack.c.b16 %v2075, %v2075
  %2080 = vst [vmem:[%s7] sm:$0xf] %v2076
  %2081 = vst [vmem:[%s7 + $0x4] sm:$0xf] %v2077
  // Predicated region
  $region30: #{mlp_forward.1} parent=0 // pred_check
    _
  $region31: #{mlp_forward.1} parent=0 // pred_check_branch
    %2083 = sbr.rel (0) target = $region33
  $region32: #{mlp_forward.1} parent=0 // pred_region
    _
  $region33: #{mlp_forward.1} parent=0 // pred_fallthru
    _
  // Predicated region
  $region34: #{mlp_forward.1} parent=0 // pred_check
    _
  $region35: #{mlp_forward.1} parent=0 // pred_check_branch
    %2085 = sbr.rel (0) target = $region37
  $region36: #{mlp_forward.1} parent=0 // pred_region
    _
  $region37: #{mlp_forward.1} parent=0 // pred_fallthru
    _

</llo_original>
